<compile_context>
chip_gen: v7x
topology: tpu7x:2x2x1
jax: 0.10.0
libtpu: 0.0.40
codegen_flags: <defaults>
</compile_context>

<pallas_src>
import math
import functools

import jax
import jax.numpy as jnp
from jax import lax
from jax.experimental import pallas as pl
from jax.experimental.pallas import tpu as pltpu

# Above the 16/32 MiB default scoped-VMEM limit, below v7x's 64 MiB physical.
_VMEM_LIMIT = 48 * 1024 * 1024


def _pick_tile(dim, pref, align):
    """Largest tile <= pref that divides `dim` and is a multiple of `align`;
    falls back to the full dimension (always legal per the (8,128) rule)."""
    t = min(pref, dim)
    t -= t % align
    while t >= align:
        if dim % t == 0:
            return t
        t -= align
    return dim


# ----------------------------------------------------------------------------
# Kernel 1: tiled dense layer  y = x @ W + b   (W stored as [in, out])
# ----------------------------------------------------------------------------
def _linear_kernel(x_ref, w_ref, b_ref, o_ref, acc_ref):
    k_i = pl.program_id(2)

    @pl.when(k_i == 0)
    def _init():
        acc_ref[...] = jnp.zeros_like(acc_ref)

    acc_ref[...] += jnp.dot(x_ref[...], w_ref[...],
                            preferred_element_type=jnp.float32)

    @pl.when(k_i == pl.num_programs(2) - 1)
    def _finalize():
        o_ref[...] = (acc_ref[...] + b_ref[...]).astype(o_ref.dtype)


def linear_pallas(x, w, b, *, out_dtype=None, compute_dtype=None,
                  tm=256, tn=256, tk=512):
    """y = x @ w + b.  x: (M, K), w: (K, N) (torch weight transposed), b: (N,)."""
    M, K = x.shape
    K2, N = w.shape
    assert K == K2 and b.shape == (N,)
    out_dtype = out_dtype if out_dtype is not None else x.dtype
    if compute_dtype is not None:          # bf16 MXU operands, f32 accumulation
        x = x.astype(compute_dtype)
        w = w.astype(compute_dtype)
    b2 = b.astype(jnp.float32).reshape(1, N)

    tm = _pick_tile(M, tm, 8)
    tn = _pick_tile(N, tn, 128)
    tk = _pick_tile(K, tk, 128)
    grid = (M // tm, N // tn, K // tk)

    return pl.pallas_call(
        _linear_kernel,
        out_shape=jax.ShapeDtypeStruct((M, N), out_dtype),
        grid=grid,
        in_specs=[
            pl.BlockSpec((tm, tk), lambda i, j, k: (i, k)),
            pl.BlockSpec((tk, tn), lambda i, j, k: (k, j)),
            pl.BlockSpec((1, tn), lambda i, j, k: (0, j)),
        ],
        out_specs=pl.BlockSpec((tm, tn), lambda i, j, k: (i, j)),
        scratch_shapes=[pltpu.VMEM((tm, tn), jnp.float32)],
        compiler_params=pltpu.CompilerParams(
            dimension_semantics=("parallel", "parallel", "arbitrary"),
            vmem_limit_bytes=_VMEM_LIMIT),
    )(x, w, b2)


# ----------------------------------------------------------------------------
# Kernel 2: multi-head scaled-dot-product attention, flash-style online
# softmax over KV blocks.  One grid step = (batch b, q-block qi, kv-block kv),
# all heads processed inside the step.  Layout is (B, S, d_model) with head
# `hh` occupying columns [hh*d_k, (hh+1)*d_k).
# ----------------------------------------------------------------------------
def _flash_mha_kernel(q_ref, k_ref, v_ref, o_ref, m_ref, l_ref, acc_ref,
                      *, num_heads, d_k, scale):
    kv_i = pl.program_id(2)

    @pl.when(kv_i == 0)
    def _init():
        m_ref[...] = jnp.full_like(m_ref, -jnp.inf)
        l_ref[...] = jnp.zeros_like(l_ref)
        acc_ref[...] = jnp.zeros_like(acc_ref)

    for hh in range(num_heads):                       # static unroll over heads
        c0, c1 = hh * d_k, (hh + 1) * d_k
        qh = q_ref[0, :, c0:c1] * scale               # (tq, d_k); scale folded into Q
        kh = k_ref[0, :, c0:c1]                       # (tkv, d_k)
        vh = v_ref[0, :, c0:c1]                       # (tkv, d_k)

        # Q @ K^T without an XLU transpose: contract the last dims directly.
        s = lax.dot_general(qh, kh, (((1,), (1,)), ((), ())),
                            preferred_element_type=jnp.float32)   # (tq, tkv) f32

        m_prev = m_ref[hh]                            # (tq, 1)
        l_prev = l_ref[hh]
        m_new = jnp.maximum(m_prev, jnp.max(s, axis=-1, keepdims=True))
        alpha = jnp.exp(m_prev - m_new)               # rescale of previous blocks
        p = jnp.exp(s - m_new)                        # f32 softmax numerator

        pv = lax.dot_general(p.astype(vh.dtype), vh, (((1,), (0,)), ((), ())),
                             preferred_element_type=jnp.float32)  # (tq, d_k)

        l_ref[hh] = alpha * l_prev + jnp.sum(p, axis=-1, keepdims=True)
        acc_ref[hh] = alpha * acc_ref[hh] + pv
        m_ref[hh] = m_new

    @pl.when(kv_i == pl.num_programs(2) - 1)
    def _finalize():
        for hh in range(num_heads):
            inv_l = pl.reciprocal(l_ref[hh], approx=True)         # EUP slot
            o_ref[0, :, hh * d_k:(hh + 1) * d_k] = (
                acc_ref[hh] * inv_l).astype(o_ref.dtype)


def attention_pallas(q, k, v, num_heads, *, tq=256, tkv=256):
    """q, k, v: (B, S, d_model) with heads contiguous along the last dim.
    Returns (B, S, d_model) = concat_h softmax(Q_h K_h^T / sqrt(d_k)) V_h."""
    B, S, d_model = q.shape
    assert k.shape == (B, S, d_model) and v.shape == (B, S, d_model)
    assert d_model % num_heads == 0
    d_k = d_model // num_heads

    tq = _pick_tile(S, tq, 8)
    tkv = _pick_tile(S, tkv, 8)
    grid = (B, S // tq, S // tkv)

    kernel = functools.partial(_flash_mha_kernel, num_heads=num_heads, d_k=d_k,
                               scale=1.0 / math.sqrt(d_k))

    q_spec = pl.BlockSpec((1, tq, d_model), lambda b, qi, kv: (b, qi, 0))
    kv_spec = pl.BlockSpec((1, tkv, d_model), lambda b, qi, kv: (b, kv, 0))

    return pl.pallas_call(
        kernel,
        out_shape=jax.ShapeDtypeStruct((B, S, d_model), q.dtype),
        grid=grid,
        in_specs=[q_spec, kv_spec, kv_spec],
        out_specs=pl.BlockSpec((1, tq, d_model), lambda b, qi, kv: (b, qi, 0)),
        scratch_shapes=[
            pltpu.VMEM((num_heads, tq, 1), jnp.float32),    # running max  m
            pltpu.VMEM((num_heads, tq, 1), jnp.float32),    # running sum  l
            pltpu.VMEM((num_heads, tq, d_k), jnp.float32),  # unnormalized PV acc
        ],
        compiler_params=pltpu.CompilerParams(
            dimension_semantics=("parallel", "parallel", "arbitrary"),
            vmem_limit_bytes=_VMEM_LIMIT),
    )(q, k, v)


# ----------------------------------------------------------------------------
# MultiHeaderAttention forward (glue in plain JAX, hot paths in Pallas)
# ----------------------------------------------------------------------------
def init_params(key, d_model):
    """4 x Linear(d_model, d_model); weights stored [in, out] (torch [out,in]^T)."""
    keys = jax.random.split(key, 8)
    bound = 1.0 / math.sqrt(d_model)
    params = {}
    for i, name in enumerate(("q", "k", "v", "o")):
        params[f"w{name}"] = jax.random.uniform(
            keys[2 * i], (d_model, d_model), jnp.float32, -bound, bound)
        params[f"b{name}"] = jax.random.uniform(
            keys[2 * i + 1], (d_model,), jnp.float32, -bound, bound)
    return params


def multi_header_self_attention(params, x, h, *, compute_dtype=None,
                                attn_tq=256, attn_tkv=256):
    """Self-attention fast path (query == key == value == x): the three input
    projections are fused into one matmul against a [d_model, 3*d_model] weight."""
    B, S, d_model = x.shape
    orig_dtype = x.dtype
    proj_dtype = compute_dtype if compute_dtype is not None else orig_dtype

    w_qkv = jnp.concatenate([params["wq"], params["wk"], params["wv"]], axis=1)
    b_qkv = jnp.concatenate([params["bq"], params["bk"], params["bv"]])

    qkv = linear_pallas(x.reshape(B * S, d_model), w_qkv, b_qkv,
                        compute_dtype=compute_dtype, out_dtype=proj_dtype)
    q2, k2, v2 = jnp.split(qkv, 3, axis=-1)            # cheap column slices
    q3 = q2.reshape(B, S, d_model)                      # free leading-dim reshape
    k3 = k2.reshape(B, S, d_model)
    v3 = v2.reshape(B, S, d_model)

    attn = attention_pallas(q3, k3, v3, h, tq=attn_tq, tkv=attn_tkv)

    out = linear_pallas(attn.reshape(B * S, d_model), params["wo"], params["bo"],
                        compute_dtype=compute_dtype, out_dtype=orig_dtype)
    return out.reshape(B, S, d_model)


def multi_header_attention(params, query, key, value, h, *, compute_dtype=None,
                           attn_tq=256, attn_tkv=256):
    """General (cross-attention capable) path, matching the module signature."""
    B, S, d_model = query.shape
    orig_dtype = query.dtype
    proj_dtype = compute_dtype if compute_dtype is not None else orig_dtype

    def project(x, w, b):
        y = linear_pallas(x.reshape(B * S, d_model), w, b,
                          compute_dtype=compute_dtype, out_dtype=proj_dtype)
        return y.reshape(B, S, d_model)

    q3 = project(query, params["wq"], params["bq"])
    k3 = project(key,   params["wk"], params["bk"])
    v3 = project(value, params["wv"], params["bv"])

    attn = attention_pallas(q3, k3, v3, h, tq=attn_tq, tkv=attn_tkv)

    out = linear_pallas(attn.reshape(B * S, d_model), params["wo"], params["bo"],
                        compute_dtype=compute_dtype, out_dtype=orig_dtype)
    return out.reshape(B, S, d_model)


# ----------------------------------------------------------------------------
# Pure-JAX reference (mirrors the PyTorch module) for sanity checks
# ----------------------------------------------------------------------------
def reference(params, query, key, value, h):
    B, S, d_model = query.shape
    d_k = d_model // h

    def proj(x, w, b):
        y = x.reshape(B * S, d_model) @ w + b
        return y.reshape(B, S, h, d_k).transpose(0, 2, 1, 3)

    q = proj(query, params["wq"], params["bq"])
    k = proj(key,   params["wk"], params["bk"])
    v = proj(value, params["wv"], params["bv"])
    scores = jnp.einsum("bhqd,bhkd->bhqk", q, k) / math.sqrt(d_k)
    p = jax.nn.softmax(scores, axis=-1)
    o = jnp.einsum("bhqk,bhkd->bhqd", p, v)
    x = o.transpose(0, 2, 1, 3).reshape(B * S, d_model)
    return (x @ params["wo"] + params["bo"]).reshape(B, S, d_model)


if __name__ == "__main__":
    root = jax.random.PRNGKey(0)
    k_par, k_x, k_q, k_k, k_v, k_par2, k_x2 = jax.random.split(root, 7)

    # Tolerances account for the MXU's default f32 matmul precision and the
    # approximate (EUP) reciprocal used in the softmax normalization.

    # ---- test 1: toy self-attention, f32, fused-QKV path -------------------
    B, S, d_model, h = 2, 8, 32, 4
    params = init_params(k_par, d_model)
    x = jax.random.normal(k_x, (B, S, d_model), jnp.float32)

    self_attn_f32 = jax.jit(functools.partial(
        multi_header_self_attention, h=h, compute_dtype=jnp.float32))
    out1 = jax.block_until_ready(self_attn_f32(params, x))
    ref1 = reference(params, x, x, x, h)
    assert out1.shape == (B, S, d_model)
    assert jnp.allclose(out1, ref1, atol=1e-2, rtol=1e-2), "self-attn f32 mismatch"

    # ---- test 2: toy cross-attention, f32, general 3-projection path -------
    q_in = jax.random.normal(k_q, (B, S, d_model), jnp.float32)
    k_in = jax.random.normal(k_k, (B, S, d_model), jnp.float32)
    v_in = jax.random.normal(k_v, (B, S, d_model), jnp.float32)
    cross_f32 = jax.jit(functools.partial(
        multi_header_attention, h=h, compute_dtype=jnp.float32))
    out2 = jax.block_until_ready(cross_f32(params, q_in, k_in, v_in))
    ref2 = reference(params, q_in, k_in, v_in, h)
    assert jnp.allclose(out2, ref2, atol=1e-2, rtol=1e-2), "cross-attn f32 mismatch"

    # ---- test 3: multi-block grids (online softmax over several KV blocks) -
    B2, S2, d_model2, h2 = 2, 256, 256, 4
    params2 = init_params(k_par2, d_model2)
    x2 = jax.random.normal(k_x2, (B2, S2, d_model2), jnp.float32)
    big_f32 = jax.jit(functools.partial(
        multi_header_self_attention, h=h2, compute_dtype=jnp.float32,
        attn_tq=128, attn_tkv=128))
    out3 = jax.block_until_ready(big_f32(params2, x2))
    ref3 = reference(params2, x2, x2, x2, h2)
    assert jnp.allclose(out3, ref3, atol=5e-2, rtol=5e-2), "multi-block mismatch"

    # ---- test 4: bf16 MXU operands / f32 accumulation (v5e/v6e/v7x path) ---
    self_attn_bf16 = jax.jit(functools.partial(
        multi_header_self_attention, h=h, compute_dtype=jnp.bfloat16))
    out4 = jax.block_until_ready(self_attn_bf16(params, x))
    assert out4.shape == (B, S, d_model) and out4.dtype == jnp.float32
    assert jnp.allclose(out4.astype(jnp.float32), ref1,
                        atol=1.5e-1, rtol=1.5e-1), "bf16 path mismatch"

    print("KERNEL_OK")
</pallas_src>

<mosaic_0001>
module attributes {stable_mosaic.version = 11 : i64} {
  func.func @_linear_kernel(%arg0: i32, %arg1: i32, %arg2: i32, %arg3: memref<16x32xf32, #tpu.memory_space<vmem>>, %arg4: memref<32x96xf32, #tpu.memory_space<vmem>>, %arg5: memref<1x96xf32, #tpu.memory_space<vmem>>, %arg6: memref<16x96xf32, #tpu.memory_space<vmem>>, %arg7: memref<16x96xf32, #tpu.memory_space<vmem>>) attributes {dimension_semantics = [#tpu.dimension_semantics<parallel>, #tpu.dimension_semantics<parallel>, #tpu.dimension_semantics<arbitrary>], iteration_bounds = array<i64: 1, 1, 1>, scalar_prefetch = 0 : i64, scratch_operands = 1 : i64, tpu.core_type = #tpu.core_type<tc>, window_params = [{transform_indices = @transform_0, window_bounds = array<i64: 16, 32>}, {transform_indices = @transform_1, window_bounds = array<i64: 32, 96>}, {transform_indices = @transform_2, window_bounds = array<i64: 1, 96>}, {transform_indices = @transform_3, window_bounds = array<i64: 16, 96>}]} {
    %c0_i32 = arith.constant 0 : i32
    %0 = arith.cmpi eq, %arg2, %c0_i32 : i32
    %1 = arith.extui %0 : i1 to i32
    %c0_i32_0 = arith.constant 0 : i32
    %2 = arith.cmpi ne, %1, %c0_i32_0 : i32
    scf.if %2 {
      %cst_10 = arith.constant 0.000000e+00 : f32
      %12 = vector.broadcast %cst_10 : f32 to vector<16x96xf32>
      %c0_11 = arith.constant 0 : index
      %c0_12 = arith.constant 0 : index
      %13 = vector.load %arg7[%c0_11, %c0_12] : memref<16x96xf32, #tpu.memory_space<vmem>>, vector<16x96xf32>
      tpu.vector_store %arg7[%c0_11, %c0_12], %12 {strides = array<i32>} : memref<16x96xf32, #tpu.memory_space<vmem>>, vector<16x96xf32>,
    } else {
    }
    %c0 = arith.constant 0 : index
    %c0_1 = arith.constant 0 : index
    %3 = vector.load %arg7[%c0, %c0_1] : memref<16x96xf32, #tpu.memory_space<vmem>>, vector<16x96xf32>
    %c0_2 = arith.constant 0 : index
    %c0_3 = arith.constant 0 : index
    %4 = vector.load %arg3[%c0_2, %c0_3] : memref<16x32xf32, #tpu.memory_space<vmem>>, vector<16x32xf32>
    %c0_4 = arith.constant 0 : index
    %c0_5 = arith.constant 0 : index
    %5 = vector.load %arg4[%c0_4, %c0_5] : memref<32x96xf32, #tpu.memory_space<vmem>>, vector<32x96xf32>
    %cst = arith.constant dense<0.000000e+00> : vector<16x96xf32>
    %6 = tpu.matmul %4, %5, %cst {dimension_numbers = #tpu.dot_dimension_numbers<[1], [0], [0], [1], [0, 0, 1, 1], [], []>} : vector<16x32xf32>, vector<32x96xf32>, vector<16x96xf32> -> vector<16x96xf32>
    %7 = arith.addf %3, %6 : vector<16x96xf32>
    %c0_6 = arith.constant 0 : index
    %c0_7 = arith.constant 0 : index
    %8 = vector.load %arg7[%c0_6, %c0_7] : memref<16x96xf32, #tpu.memory_space<vmem>>, vector<16x96xf32>
    tpu.vector_store %arg7[%c0_6, %c0_7], %7 {strides = array<i32>} : memref<16x96xf32, #tpu.memory_space<vmem>>, vector<16x96xf32>,
    %c0_i32_8 = arith.constant 0 : i32
    %9 = arith.cmpi eq, %arg2, %c0_i32_8 : i32
    %10 = arith.extui %9 : i1 to i32
    %c0_i32_9 = arith.constant 0 : i32
    %11 = arith.cmpi ne, %10, %c0_i32_9 : i32
    scf.if %11 {
      %c0_10 = arith.constant 0 : index
      %c0_11 = arith.constant 0 : index
      %12 = vector.load %arg7[%c0_10, %c0_11] : memref<16x96xf32, #tpu.memory_space<vmem>>, vector<16x96xf32>
      %c0_12 = arith.constant 0 : index
      %c0_13 = arith.constant 0 : index
      %13 = vector.load %arg5[%c0_12, %c0_13] : memref<1x96xf32, #tpu.memory_space<vmem>>, vector<1x96xf32>
      %14 = vector.broadcast %13 : vector<1x96xf32> to vector<16x96xf32>
      %15 = arith.addf %12, %14 : vector<16x96xf32>
      %c0_14 = arith.constant 0 : index
      %c0_15 = arith.constant 0 : index
      %16 = vector.load %arg6[%c0_14, %c0_15] : memref<16x96xf32, #tpu.memory_space<vmem>>, vector<16x96xf32>
      tpu.vector_store %arg6[%c0_14, %c0_15], %15 {strides = array<i32>} : memref<16x96xf32, #tpu.memory_space<vmem>>, vector<16x96xf32>,
    } else {
    }
    return
  }
  func.func @transform_0(%arg0: i32, %arg1: i32, %arg2: i32) -> (i32, i32) {
    %c0_i32 = arith.constant 0 : i32
    return %arg0, %arg2 : i32, i32
  }
  func.func @transform_1(%arg0: i32, %arg1: i32, %arg2: i32) -> (i32, i32) {
    %c0_i32 = arith.constant 0 : i32
    return %arg2, %arg1 : i32, i32
  }
  func.func @transform_2(%arg0: i32, %arg1: i32, %arg2: i32) -> (i32, i32) {
    %c0_i32 = arith.constant 0 : i32
    %c0_i32_0 = arith.constant 0 : i32
    return %c0_i32, %arg1 : i32, i32
  }
  func.func @transform_3(%arg0: i32, %arg1: i32, %arg2: i32) -> (i32, i32) {
    %c0_i32 = arith.constant 0 : i32
    return %arg0, %arg1 : i32, i32
  }
}

module attributes {stable_mosaic.version = 11 : i64} {
  func.func @_linear_kernel(%arg0: i32, %arg1: i32, %arg2: i32, %arg3: memref<16x32xf32, #tpu.memory_space<vmem>>, %arg4: memref<32x32xf32, #tpu.memory_space<vmem>>, %arg5: memref<1x32xf32, #tpu.memory_space<vmem>>, %arg6: memref<16x32xf32, #tpu.memory_space<vmem>>, %arg7: memref<16x32xf32, #tpu.memory_space<vmem>>) attributes {dimension_semantics = [#tpu.dimension_semantics<parallel>, #tpu.dimension_semantics<parallel>, #tpu.dimension_semantics<arbitrary>], iteration_bounds = array<i64: 1, 1, 1>, scalar_prefetch = 0 : i64, scratch_operands = 1 : i64, tpu.core_type = #tpu.core_type<tc>, window_params = [{transform_indices = @transform_0, window_bounds = array<i64: 16, 32>}, {transform_indices = @transform_1, window_bounds = array<i64: 32, 32>}, {transform_indices = @transform_2, window_bounds = array<i64: 1, 32>}, {transform_indices = @transform_3, window_bounds = array<i64: 16, 32>}]} {
    %c0_i32 = arith.constant 0 : i32
    %0 = arith.cmpi eq, %arg2, %c0_i32 : i32
    %1 = arith.extui %0 : i1 to i32
    %c0_i32_0 = arith.constant 0 : i32
    %2 = arith.cmpi ne, %1, %c0_i32_0 : i32
    scf.if %2 {
      %cst_10 = arith.constant 0.000000e+00 : f32
      %12 = vector.broadcast %cst_10 : f32 to vector<16x32xf32>
      %c0_11 = arith.constant 0 : index
      %c0_12 = arith.constant 0 : index
      %13 = vector.load %arg7[%c0_11, %c0_12] : memref<16x32xf32, #tpu.memory_space<vmem>>, vector<16x32xf32>
      tpu.vector_store %arg7[%c0_11, %c0_12], %12 {strides = array<i32>} : memref<16x32xf32, #tpu.memory_space<vmem>>, vector<16x32xf32>,
    } else {
    }
    %c0 = arith.constant 0 : index
    %c0_1 = arith.constant 0 : index
    %3 = vector.load %arg7[%c0, %c0_1] : memref<16x32xf32, #tpu.memory_space<vmem>>, vector<16x32xf32>
    %c0_2 = arith.constant 0 : index
    %c0_3 = arith.constant 0 : index
    %4 = vector.load %arg3[%c0_2, %c0_3] : memref<16x32xf32, #tpu.memory_space<vmem>>, vector<16x32xf32>
    %c0_4 = arith.constant 0 : index
    %c0_5 = arith.constant 0 : index
    %5 = vector.load %arg4[%c0_4, %c0_5] : memref<32x32xf32, #tpu.memory_space<vmem>>, vector<32x32xf32>
    %cst = arith.constant dense<0.000000e+00> : vector<16x32xf32>
    %6 = tpu.matmul %4, %5, %cst {dimension_numbers = #tpu.dot_dimension_numbers<[1], [0], [0], [1], [0, 0, 1, 1], [], []>} : vector<16x32xf32>, vector<32x32xf32>, vector<16x32xf32> -> vector<16x32xf32>
    %7 = arith.addf %3, %6 : vector<16x32xf32>
    %c0_6 = arith.constant 0 : index
    %c0_7 = arith.constant 0 : index
    %8 = vector.load %arg7[%c0_6, %c0_7] : memref<16x32xf32, #tpu.memory_space<vmem>>, vector<16x32xf32>
    tpu.vector_store %arg7[%c0_6, %c0_7], %7 {strides = array<i32>} : memref<16x32xf32, #tpu.memory_space<vmem>>, vector<16x32xf32>,
    %c0_i32_8 = arith.constant 0 : i32
    %9 = arith.cmpi eq, %arg2, %c0_i32_8 : i32
    %10 = arith.extui %9 : i1 to i32
    %c0_i32_9 = arith.constant 0 : i32
    %11 = arith.cmpi ne, %10, %c0_i32_9 : i32
    scf.if %11 {
      %c0_10 = arith.constant 0 : index
      %c0_11 = arith.constant 0 : index
      %12 = vector.load %arg7[%c0_10, %c0_11] : memref<16x32xf32, #tpu.memory_space<vmem>>, vector<16x32xf32>
      %c0_12 = arith.constant 0 : index
      %c0_13 = arith.constant 0 : index
      %13 = vector.load %arg5[%c0_12, %c0_13] : memref<1x32xf32, #tpu.memory_space<vmem>>, vector<1x32xf32>
      %14 = vector.broadcast %13 : vector<1x32xf32> to vector<16x32xf32>
      %15 = arith.addf %12, %14 : vector<16x32xf32>
      %c0_14 = arith.constant 0 : index
      %c0_15 = arith.constant 0 : index
      %16 = vector.load %arg6[%c0_14, %c0_15] : memref<16x32xf32, #tpu.memory_space<vmem>>, vector<16x32xf32>
      tpu.vector_store %arg6[%c0_14, %c0_15], %15 {strides = array<i32>} : memref<16x32xf32, #tpu.memory_space<vmem>>, vector<16x32xf32>,
    } else {
    }
    return
  }
  func.func @transform_0(%arg0: i32, %arg1: i32, %arg2: i32) -> (i32, i32) {
    %c0_i32 = arith.constant 0 : i32
    return %arg0, %arg2 : i32, i32
  }
  func.func @transform_1(%arg0: i32, %arg1: i32, %arg2: i32) -> (i32, i32) {
    %c0_i32 = arith.constant 0 : i32
    return %arg2, %arg1 : i32, i32
  }
  func.func @transform_2(%arg0: i32, %arg1: i32, %arg2: i32) -> (i32, i32) {
    %c0_i32 = arith.constant 0 : i32
    %c0_i32_0 = arith.constant 0 : i32
    return %c0_i32, %arg1 : i32, i32
  }
  func.func @transform_3(%arg0: i32, %arg1: i32, %arg2: i32) -> (i32, i32) {
    %c0_i32 = arith.constant 0 : i32
    return %arg0, %arg1 : i32, i32
  }
}

module attributes {stable_mosaic.version = 11 : i64} {
  func.func @_flash_mha_kernel(%arg0: i32, %arg1: i32, %arg2: i32, %arg3: memref<1x8x32xf32, #tpu.memory_space<vmem>>, %arg4: memref<1x8x32xf32, #tpu.memory_space<vmem>>, %arg5: memref<1x8x32xf32, #tpu.memory_space<vmem>>, %arg6: memref<1x8x32xf32, #tpu.memory_space<vmem>>, %arg7: memref<4x8x1xf32, #tpu.memory_space<vmem>>, %arg8: memref<4x8x1xf32, #tpu.memory_space<vmem>>, %arg9: memref<4x8x8xf32, #tpu.memory_space<vmem>>) attributes {dimension_semantics = [#tpu.dimension_semantics<parallel>, #tpu.dimension_semantics<parallel>, #tpu.dimension_semantics<arbitrary>], iteration_bounds = array<i64: 2, 1, 1>, scalar_prefetch = 0 : i64, scratch_operands = 3 : i64, tpu.core_type = #tpu.core_type<tc>, window_params = [{transform_indices = @transform_0, window_bounds = array<i64: 1, 8, 32>}, {transform_indices = @transform_1, window_bounds = array<i64: 1, 8, 32>}, {transform_indices = @transform_2, window_bounds = array<i64: 1, 8, 32>}, {transform_indices = @transform_3, window_bounds = array<i64: 1, 8, 32>}]} {
    %c0_i32 = arith.constant 0 : i32
    %0 = arith.cmpi eq, %arg2, %c0_i32 : i32
    %1 = arith.extui %0 : i1 to i32
    %c0_i32_0 = arith.constant 0 : i32
    %2 = arith.cmpi ne, %1, %c0_i32_0 : i32
    scf.if %2 {
      %cst_123 = arith.constant 0xFF800000 : f32
      %166 = vector.broadcast %cst_123 : f32 to vector<4x8x1xf32>
      %c0_124 = arith.constant 0 : index
      %c0_125 = arith.constant 0 : index
      %c0_126 = arith.constant 0 : index
      %167 = vector.load %arg7[%c0_124, %c0_125, %c0_126] : memref<4x8x1xf32, #tpu.memory_space<vmem>>, vector<4x8x1xf32>
      tpu.vector_store %arg7[%c0_124, %c0_125, %c0_126], %166 {strides = array<i32>} : memref<4x8x1xf32, #tpu.memory_space<vmem>>, vector<4x8x1xf32>,
      %cst_127 = arith.constant 0.000000e+00 : f32
      %168 = vector.broadcast %cst_127 : f32 to vector<4x8x1xf32>
      %c0_128 = arith.constant 0 : index
      %c0_129 = arith.constant 0 : index
      %c0_130 = arith.constant 0 : index
      %169 = vector.load %arg8[%c0_128, %c0_129, %c0_130] : memref<4x8x1xf32, #tpu.memory_space<vmem>>, vector<4x8x1xf32>
      tpu.vector_store %arg8[%c0_128, %c0_129, %c0_130], %168 {strides = array<i32>} : memref<4x8x1xf32, #tpu.memory_space<vmem>>, vector<4x8x1xf32>,
      %cst_131 = arith.constant 0.000000e+00 : f32
      %170 = vector.broadcast %cst_131 : f32 to vector<4x8x8xf32>
      %c0_132 = arith.constant 0 : index
      %c0_133 = arith.constant 0 : index
      %c0_134 = arith.constant 0 : index
      %171 = vector.load %arg9[%c0_132, %c0_133, %c0_134] : memref<4x8x8xf32, #tpu.memory_space<vmem>>, vector<4x8x8xf32>
      tpu.vector_store %arg9[%c0_132, %c0_133, %c0_134], %170 {strides = array<i32>} : memref<4x8x8xf32, #tpu.memory_space<vmem>>, vector<4x8x8xf32>,
    } else {
    }
    %c0 = arith.constant 0 : index
    %c0_1 = arith.constant 0 : index
    %c0_2 = arith.constant 0 : index
    %3 = vector.load %arg3[%c0, %c0_1, %c0_2] : memref<1x8x32xf32, #tpu.memory_space<vmem>>, vector<1x8x8xf32>
    %4 = vector.shape_cast %3 : vector<1x8x8xf32> to vector<8x8xf32>
    %cst = arith.constant 0.353553385 : f32
    %5 = vector.broadcast %cst : f32 to vector<8x8xf32>
    %6 = arith.mulf %4, %5 : vector<8x8xf32>
    %c0_3 = arith.constant 0 : index
    %c0_4 = arith.constant 0 : index
    %c0_5 = arith.constant 0 : index
    %7 = vector.load %arg4[%c0_3, %c0_4, %c0_5] : memref<1x8x32xf32, #tpu.memory_space<vmem>>, vector<1x8x8xf32>
    %8 = vector.shape_cast %7 : vector<1x8x8xf32> to vector<8x8xf32>
    %c0_6 = arith.constant 0 : index
    %c0_7 = arith.constant 0 : index
    %c0_8 = arith.constant 0 : index
    %9 = vector.load %arg5[%c0_6, %c0_7, %c0_8] : memref<1x8x32xf32, #tpu.memory_space<vmem>>, vector<1x8x8xf32>
    %10 = vector.shape_cast %9 : vector<1x8x8xf32> to vector<8x8xf32>
    %cst_9 = arith.constant dense<0.000000e+00> : vector<8x8xf32>
    %11 = tpu.matmul %6, %8, %cst_9 {dimension_numbers = #tpu.dot_dimension_numbers<[1], [1], [0], [0], [0, 0, 1, 0], [], []>} : vector<8x8xf32>, vector<8x8xf32>, vector<8x8xf32> -> vector<8x8xf32>
    %c0_10 = arith.constant 0 : index
    %c0_11 = arith.constant 0 : index
    %c0_12 = arith.constant 0 : index
    %12 = vector.load %arg7[%c0_10, %c0_11, %c0_12] : memref<4x8x1xf32, #tpu.memory_space<vmem>>, vector<1x8x1xf32>
    %13 = vector.shape_cast %12 : vector<1x8x1xf32> to vector<8x1xf32>
    %c0_13 = arith.constant 0 : index
    %c0_14 = arith.constant 0 : index
    %c0_15 = arith.constant 0 : index
    %14 = vector.load %arg8[%c0_13, %c0_14, %c0_15] : memref<4x8x1xf32, #tpu.memory_space<vmem>>, vector<1x8x1xf32>
    %15 = vector.shape_cast %14 : vector<1x8x1xf32> to vector<8x1xf32>
    %cst_16 = arith.constant dense<0xFF800000> : vector<8xf32>
    %16 = vector.multi_reduction <maximumf>, %11, %cst_16 [1] : vector<8x8xf32> to vector<8xf32>
    %17 = vector.shape_cast %16 : vector<8xf32> to vector<8x1xf32>
    %18 = arith.maximumf %13, %17 : vector<8x1xf32>
    %19 = arith.subf %13, %18 : vector<8x1xf32>
    %20 = math.exp %19 : vector<8x1xf32>
    %21 = vector.broadcast %18 : vector<8x1xf32> to vector<8x8xf32>
    %22 = arith.subf %11, %21 : vector<8x8xf32>
    %23 = math.exp %22 : vector<8x8xf32>
    %cst_17 = arith.constant dense<0.000000e+00> : vector<8x8xf32>
    %24 = tpu.matmul %23, %10, %cst_17 {dimension_numbers = #tpu.dot_dimension_numbers<[1], [0], [0], [1], [0, 0, 1, 1], [], []>} : vector<8x8xf32>, vector<8x8xf32>, vector<8x8xf32> -> vector<8x8xf32>
    %25 = arith.mulf %20, %15 : vector<8x1xf32>
    %cst_18 = arith.constant dense<0.000000e+00> : vector<8xf32>
    %26 = vector.multi_reduction <add>, %23, %cst_18 [1] : vector<8x8xf32> to vector<8xf32>
    %27 = vector.shape_cast %26 : vector<8xf32> to vector<8x1xf32>
    %28 = arith.addf %25, %27 : vector<8x1xf32>
    %c0_19 = arith.constant 0 : index
    %c0_20 = arith.constant 0 : index
    %c0_21 = arith.constant 0 : index
    %29 = vector.load %arg8[%c0_19, %c0_20, %c0_21] : memref<4x8x1xf32, #tpu.memory_space<vmem>>, vector<1x8x1xf32>
    %30 = vector.shape_cast %29 : vector<1x8x1xf32> to vector<8x1xf32>
    %31 = vector.shape_cast %28 : vector<8x1xf32> to vector<1x8x1xf32>
    tpu.vector_store %arg8[%c0_19, %c0_20, %c0_21], %31 {strides = array<i32>} : memref<4x8x1xf32, #tpu.memory_space<vmem>>, vector<1x8x1xf32>,
    %c0_22 = arith.constant 0 : index
    %c0_23 = arith.constant 0 : index
    %c0_24 = arith.constant 0 : index
    %32 = vector.load %arg9[%c0_22, %c0_23, %c0_24] : memref<4x8x8xf32, #tpu.memory_space<vmem>>, vector<1x8x8xf32>
    %33 = vector.shape_cast %32 : vector<1x8x8xf32> to vector<8x8xf32>
    %34 = vector.broadcast %20 : vector<8x1xf32> to vector<8x8xf32>
    %35 = arith.mulf %34, %33 : vector<8x8xf32>
    %36 = arith.addf %35, %24 : vector<8x8xf32>
    %c0_25 = arith.constant 0 : index
    %c0_26 = arith.constant 0 : index
    %c0_27 = arith.constant 0 : index
    %37 = vector.load %arg9[%c0_25, %c0_26, %c0_27] : memref<4x8x8xf32, #tpu.memory_space<vmem>>, vector<1x8x8xf32>
    %38 = vector.shape_cast %37 : vector<1x8x8xf32> to vector<8x8xf32>
    %39 = vector.shape_cast %36 : vector<8x8xf32> to vector<1x8x8xf32>
    tpu.vector_store %arg9[%c0_25, %c0_26, %c0_27], %39 {strides = array<i32>} : memref<4x8x8xf32, #tpu.memory_space<vmem>>, vector<1x8x8xf32>,
    %c0_28 = arith.constant 0 : index
    %c0_29 = arith.constant 0 : index
    %c0_30 = arith.constant 0 : index
    %40 = vector.load %arg7[%c0_28, %c0_29, %c0_30] : memref<4x8x1xf32, #tpu.memory_space<vmem>>, vector<1x8x1xf32>
    %41 = vector.shape_cast %40 : vector<1x8x1xf32> to vector<8x1xf32>
    %42 = vector.shape_cast %18 : vector<8x1xf32> to vector<1x8x1xf32>
    tpu.vector_store %arg7[%c0_28, %c0_29, %c0_30], %42 {strides = array<i32>} : memref<4x8x1xf32, #tpu.memory_space<vmem>>, vector<1x8x1xf32>,
    %c0_31 = arith.constant 0 : index
    %c0_32 = arith.constant 0 : index
    %c8 = arith.constant 8 : index
    %43 = vector.load %arg3[%c0_31, %c0_32, %c8] : memref<1x8x32xf32, #tpu.memory_space<vmem>>, vector<1x8x8xf32>
    %44 = vector.shape_cast %43 : vector<1x8x8xf32> to vector<8x8xf32>
    %cst_33 = arith.constant 0.353553385 : f32
    %45 = vector.broadcast %cst_33 : f32 to vector<8x8xf32>
    %46 = arith.mulf %44, %45 : vector<8x8xf32>
    %c0_34 = arith.constant 0 : index
    %c0_35 = arith.constant 0 : index
    %c8_36 = arith.constant 8 : index
    %47 = vector.load %arg4[%c0_34, %c0_35, %c8_36] : memref<1x8x32xf32, #tpu.memory_space<vmem>>, vector<1x8x8xf32>
    %48 = vector.shape_cast %47 : vector<1x8x8xf32> to vector<8x8xf32>
    %c0_37 = arith.constant 0 : index
    %c0_38 = arith.constant 0 : index
    %c8_39 = arith.constant 8 : index
    %49 = vector.load %arg5[%c0_37, %c0_38, %c8_39] : memref<1x8x32xf32, #tpu.memory_space<vmem>>, vector<1x8x8xf32>
    %50 = vector.shape_cast %49 : vector<1x8x8xf32> to vector<8x8xf32>
    %cst_40 = arith.constant dense<0.000000e+00> : vector<8x8xf32>
    %51 = tpu.matmul %46, %48, %cst_40 {dimension_numbers = #tpu.dot_dimension_numbers<[1], [1], [0], [0], [0, 0, 1, 0], [], []>} : vector<8x8xf32>, vector<8x8xf32>, vector<8x8xf32> -> vector<8x8xf32>
    %c1 = arith.constant 1 : index
    %c0_41 = arith.constant 0 : index
    %c0_42 = arith.constant 0 : index
    %52 = vector.load %arg7[%c1, %c0_41, %c0_42] : memref<4x8x1xf32, #tpu.memory_space<vmem>>, vector<1x8x1xf32>
    %53 = vector.shape_cast %52 : vector<1x8x1xf32> to vector<8x1xf32>
    %c1_43 = arith.constant 1 : index
    %c0_44 = arith.constant 0 : index
    %c0_45 = arith.constant 0 : index
    %54 = vector.load %arg8[%c1_43, %c0_44, %c0_45] : memref<4x8x1xf32, #tpu.memory_space<vmem>>, vector<1x8x1xf32>
    %55 = vector.shape_cast %54 : vector<1x8x1xf32> to vector<8x1xf32>
    %cst_46 = arith.constant dense<0xFF800000> : vector<8xf32>
    %56 = vector.multi_reduction <maximumf>, %51, %cst_46 [1] : vector<8x8xf32> to vector<8xf32>
    %57 = vector.shape_cast %56 : vector<8xf32> to vector<8x1xf32>
    %58 = arith.maximumf %53, %57 : vector<8x1xf32>
    %59 = arith.subf %53, %58 : vector<8x1xf32>
    %60 = math.exp %59 : vector<8x1xf32>
    %61 = vector.broadcast %58 : vector<8x1xf32> to vector<8x8xf32>
    %62 = arith.subf %51, %61 : vector<8x8xf32>
    %63 = math.exp %62 : vector<8x8xf32>
    %cst_47 = arith.constant dense<0.000000e+00> : vector<8x8xf32>
    %64 = tpu.matmul %63, %50, %cst_47 {dimension_numbers = #tpu.dot_dimension_numbers<[1], [0], [0], [1], [0, 0, 1, 1], [], []>} : vector<8x8xf32>, vector<8x8xf32>, vector<8x8xf32> -> vector<8x8xf32>
    %65 = arith.mulf %60, %55 : vector<8x1xf32>
    %cst_48 = arith.constant dense<0.000000e+00> : vector<8xf32>
    %66 = vector.multi_reduction <add>, %63, %cst_48 [1] : vector<8x8xf32> to vector<8xf32>
    %67 = vector.shape_cast %66 : vector<8xf32> to vector<8x1xf32>
    %68 = arith.addf %65, %67 : vector<8x1xf32>
    %c1_49 = arith.constant 1 : index
    %c0_50 = arith.constant 0 : index
    %c0_51 = arith.constant 0 : index
    %69 = vector.load %arg8[%c1_49, %c0_50, %c0_51] : memref<4x8x1xf32, #tpu.memory_space<vmem>>, vector<1x8x1xf32>
    %70 = vector.shape_cast %69 : vector<1x8x1xf32> to vector<8x1xf32>
    %71 = vector.shape_cast %68 : vector<8x1xf32> to vector<1x8x1xf32>
    tpu.vector_store %arg8[%c1_49, %c0_50, %c0_51], %71 {strides = array<i32>} : memref<4x8x1xf32, #tpu.memory_space<vmem>>, vector<1x8x1xf32>,
    %c1_52 = arith.constant 1 : index
    %c0_53 = arith.constant 0 : index
    %c0_54 = arith.constant 0 : index
    %72 = vector.load %arg9[%c1_52, %c0_53, %c0_54] : memref<4x8x8xf32, #tpu.memory_space<vmem>>, vector<1x8x8xf32>
    %73 = vector.shape_cast %72 : vector<1x8x8xf32> to vector<8x8xf32>
    %74 = vector.broadcast %60 : vector<8x1xf32> to vector<8x8xf32>
    %75 = arith.mulf %74, %73 : vector<8x8xf32>
    %76 = arith.addf %75, %64 : vector<8x8xf32>
    %c1_55 = arith.constant 1 : index
    %c0_56 = arith.constant 0 : index
    %c0_57 = arith.constant 0 : index
    %77 = vector.load %arg9[%c1_55, %c0_56, %c0_57] : memref<4x8x8xf32, #tpu.memory_space<vmem>>, vector<1x8x8xf32>
    %78 = vector.shape_cast %77 : vector<1x8x8xf32> to vector<8x8xf32>
    %79 = vector.shape_cast %76 : vector<8x8xf32> to vector<1x8x8xf32>
    tpu.vector_store %arg9[%c1_55, %c0_56, %c0_57], %79 {strides = array<i32>} : memref<4x8x8xf32, #tpu.memory_space<vmem>>, vector<1x8x8xf32>,
    %c1_58 = arith.constant 1 : index
    %c0_59 = arith.constant 0 : index
    %c0_60 = arith.constant 0 : index
    %80 = vector.load %arg7[%c1_58, %c0_59, %c0_60] : memref<4x8x1xf32, #tpu.memory_space<vmem>>, vector<1x8x1xf32>
    %81 = vector.shape_cast %80 : vector<1x8x1xf32> to vector<8x1xf32>
    %82 = vector.shape_cast %58 : vector<8x1xf32> to vector<1x8x1xf32>
    tpu.vector_store %arg7[%c1_58, %c0_59, %c0_60], %82 {strides = array<i32>} : memref<4x8x1xf32, #tpu.memory_space<vmem>>, vector<1x8x1xf32>,
    %c0_61 = arith.constant 0 : index
    %c0_62 = arith.constant 0 : index
    %c16 = arith.constant 16 : index
    %83 = vector.load %arg3[%c0_61, %c0_62, %c16] : memref<1x8x32xf32, #tpu.memory_space<vmem>>, vector<1x8x8xf32>
    %84 = vector.shape_cast %83 : vector<1x8x8xf32> to vector<8x8xf32>
    %cst_63 = arith.constant 0.353553385 : f32
    %85 = vector.broadcast %cst_63 : f32 to vector<8x8xf32>
    %86 = arith.mulf %84, %85 : vector<8x8xf32>
    %c0_64 = arith.constant 0 : index
    %c0_65 = arith.constant 0 : index
    %c16_66 = arith.constant 16 : index
    %87 = vector.load %arg4[%c0_64, %c0_65, %c16_66] : memref<1x8x32xf32, #tpu.memory_space<vmem>>, vector<1x8x8xf32>
    %88 = vector.shape_cast %87 : vector<1x8x8xf32> to vector<8x8xf32>
    %c0_67 = arith.constant 0 : index
    %c0_68 = arith.constant 0 : index
    %c16_69 = arith.constant 16 : index
    %89 = vector.load %arg5[%c0_67, %c0_68, %c16_69] : memref<1x8x32xf32, #tpu.memory_space<vmem>>, vector<1x8x8xf32>
    %90 = vector.shape_cast %89 : vector<1x8x8xf32> to vector<8x8xf32>
    %cst_70 = arith.constant dense<0.000000e+00> : vector<8x8xf32>
    %91 = tpu.matmul %86, %88, %cst_70 {dimension_numbers = #tpu.dot_dimension_numbers<[1], [1], [0], [0], [0, 0, 1, 0], [], []>} : vector<8x8xf32>, vector<8x8xf32>, vector<8x8xf32> -> vector<8x8xf32>
    %c2 = arith.constant 2 : index
    %c0_71 = arith.constant 0 : index
    %c0_72 = arith.constant 0 : index
    %92 = vector.load %arg7[%c2, %c0_71, %c0_72] : memref<4x8x1xf32, #tpu.memory_space<vmem>>, vector<1x8x1xf32>
    %93 = vector.shape_cast %92 : vector<1x8x1xf32> to vector<8x1xf32>
    %c2_73 = arith.constant 2 : index
    %c0_74 = arith.constant 0 : index
    %c0_75 = arith.constant 0 : index
    %94 = vector.load %arg8[%c2_73, %c0_74, %c0_75] : memref<4x8x1xf32, #tpu.memory_space<vmem>>, vector<1x8x1xf32>
    %95 = vector.shape_cast %94 : vector<1x8x1xf32> to vector<8x1xf32>
    %cst_76 = arith.constant dense<0xFF800000> : vector<8xf32>
    %96 = vector.multi_reduction <maximumf>, %91, %cst_76 [1] : vector<8x8xf32> to vector<8xf32>
    %97 = vector.shape_cast %96 : vector<8xf32> to vector<8x1xf32>
    %98 = arith.maximumf %93, %97 : vector<8x1xf32>
    %99 = arith.subf %93, %98 : vector<8x1xf32>
    %100 = math.exp %99 : vector<8x1xf32>
    %101 = vector.broadcast %98 : vector<8x1xf32> to vector<8x8xf32>
    %102 = arith.subf %91, %101 : vector<8x8xf32>
    %103 = math.exp %102 : vector<8x8xf32>
    %cst_77 = arith.constant dense<0.000000e+00> : vector<8x8xf32>
    %104 = tpu.matmul %103, %90, %cst_77 {dimension_numbers = #tpu.dot_dimension_numbers<[1], [0], [0], [1], [0, 0, 1, 1], [], []>} : vector<8x8xf32>, vector<8x8xf32>, vector<8x8xf32> -> vector<8x8xf32>
    %105 = arith.mulf %100, %95 : vector<8x1xf32>
    %cst_78 = arith.constant dense<0.000000e+00> : vector<8xf32>
    %106 = vector.multi_reduction <add>, %103, %cst_78 [1] : vector<8x8xf32> to vector<8xf32>
    %107 = vector.shape_cast %106 : vector<8xf32> to vector<8x1xf32>
    %108 = arith.addf %105, %107 : vector<8x1xf32>
    %c2_79 = arith.constant 2 : index
    %c0_80 = arith.constant 0 : index
    %c0_81 = arith.constant 0 : index
    %109 = vector.load %arg8[%c2_79, %c0_80, %c0_81] : memref<4x8x1xf32, #tpu.memory_space<vmem>>, vector<1x8x1xf32>
    %110 = vector.shape_cast %109 : vector<1x8x1xf32> to vector<8x1xf32>
    %111 = vector.shape_cast %108 : vector<8x1xf32> to vector<1x8x1xf32>
    tpu.vector_store %arg8[%c2_79, %c0_80, %c0_81], %111 {strides = array<i32>} : memref<4x8x1xf32, #tpu.memory_space<vmem>>, vector<1x8x1xf32>,
    %c2_82 = arith.constant 2 : index
    %c0_83 = arith.constant 0 : index
    %c0_84 = arith.constant 0 : index
    %112 = vector.load %arg9[%c2_82, %c0_83, %c0_84] : memref<4x8x8xf32, #tpu.memory_space<vmem>>, vector<1x8x8xf32>
    %113 = vector.shape_cast %112 : vector<1x8x8xf32> to vector<8x8xf32>
    %114 = vector.broadcast %100 : vector<8x1xf32> to vector<8x8xf32>
    %115 = arith.mulf %114, %113 : vector<8x8xf32>
    %116 = arith.addf %115, %104 : vector<8x8xf32>
    %c2_85 = arith.constant 2 : index
    %c0_86 = arith.constant 0 : index
    %c0_87 = arith.constant 0 : index
    %117 = vector.load %arg9[%c2_85, %c0_86, %c0_87] : memref<4x8x8xf32, #tpu.memory_space<vmem>>, vector<1x8x8xf32>
    %118 = vector.shape_cast %117 : vector<1x8x8xf32> to vector<8x8xf32>
    %119 = vector.shape_cast %116 : vector<8x8xf32> to vector<1x8x8xf32>
    tpu.vector_store %arg9[%c2_85, %c0_86, %c0_87], %119 {strides = array<i32>} : memref<4x8x8xf32, #tpu.memory_space<vmem>>, vector<1x8x8xf32>,
    %c2_88 = arith.constant 2 : index
    %c0_89 = arith.constant 0 : index
    %c0_90 = arith.constant 0 : index
    %120 = vector.load %arg7[%c2_88, %c0_89, %c0_90] : memref<4x8x1xf32, #tpu.memory_space<vmem>>, vector<1x8x1xf32>
    %121 = vector.shape_cast %120 : vector<1x8x1xf32> to vector<8x1xf32>
    %122 = vector.shape_cast %98 : vector<8x1xf32> to vector<1x8x1xf32>
    tpu.vector_store %arg7[%c2_88, %c0_89, %c0_90], %122 {strides = array<i32>} : memref<4x8x1xf32, #tpu.memory_space<vmem>>, vector<1x8x1xf32>,
    %c0_91 = arith.constant 0 : index
    %c0_92 = arith.constant 0 : index
    %c24 = arith.constant 24 : index
    %123 = vector.load %arg3[%c0_91, %c0_92, %c24] : memref<1x8x32xf32, #tpu.memory_space<vmem>>, vector<1x8x8xf32>
    %124 = vector.shape_cast %123 : vector<1x8x8xf32> to vector<8x8xf32>
    %cst_93 = arith.constant 0.353553385 : f32
    %125 = vector.broadcast %cst_93 : f32 to vector<8x8xf32>
    %126 = arith.mulf %124, %125 : vector<8x8xf32>
    %c0_94 = arith.constant 0 : index
    %c0_95 = arith.constant 0 : index
    %c24_96 = arith.constant 24 : index
    %127 = vector.load %arg4[%c0_94, %c0_95, %c24_96] : memref<1x8x32xf32, #tpu.memory_space<vmem>>, vector<1x8x8xf32>
    %128 = vector.shape_cast %127 : vector<1x8x8xf32> to vector<8x8xf32>
    %c0_97 = arith.constant 0 : index
    %c0_98 = arith.constant 0 : index
    %c24_99 = arith.constant 24 : index
    %129 = vector.load %arg5[%c0_97, %c0_98, %c24_99] : memref<1x8x32xf32, #tpu.memory_space<vmem>>, vector<1x8x8xf32>
    %130 = vector.shape_cast %129 : vector<1x8x8xf32> to vector<8x8xf32>
    %cst_100 = arith.constant dense<0.000000e+00> : vector<8x8xf32>
    %131 = tpu.matmul %126, %128, %cst_100 {dimension_numbers = #tpu.dot_dimension_numbers<[1], [1], [0], [0], [0, 0, 1, 0], [], []>} : vector<8x8xf32>, vector<8x8xf32>, vector<8x8xf32> -> vector<8x8xf32>
    %c3 = arith.constant 3 : index
    %c0_101 = arith.constant 0 : index
    %c0_102 = arith.constant 0 : index
    %132 = vector.load %arg7[%c3, %c0_101, %c0_102] : memref<4x8x1xf32, #tpu.memory_space<vmem>>, vector<1x8x1xf32>
    %133 = vector.shape_cast %132 : vector<1x8x1xf32> to vector<8x1xf32>
    %c3_103 = arith.constant 3 : index
    %c0_104 = arith.constant 0 : index
    %c0_105 = arith.constant 0 : index
    %134 = vector.load %arg8[%c3_103, %c0_104, %c0_105] : memref<4x8x1xf32, #tpu.memory_space<vmem>>, vector<1x8x1xf32>
    %135 = vector.shape_cast %134 : vector<1x8x1xf32> to vector<8x1xf32>
    %cst_106 = arith.constant dense<0xFF800000> : vector<8xf32>
    %136 = vector.multi_reduction <maximumf>, %131, %cst_106 [1] : vector<8x8xf32> to vector<8xf32>
    %137 = vector.shape_cast %136 : vector<8xf32> to vector<8x1xf32>
    %138 = arith.maximumf %133, %137 : vector<8x1xf32>
    %139 = arith.subf %133, %138 : vector<8x1xf32>
    %140 = math.exp %139 : vector<8x1xf32>
    %141 = vector.broadcast %138 : vector<8x1xf32> to vector<8x8xf32>
    %142 = arith.subf %131, %141 : vector<8x8xf32>
    %143 = math.exp %142 : vector<8x8xf32>
    %cst_107 = arith.constant dense<0.000000e+00> : vector<8x8xf32>
    %144 = tpu.matmul %143, %130, %cst_107 {dimension_numbers = #tpu.dot_dimension_numbers<[1], [0], [0], [1], [0, 0, 1, 1], [], []>} : vector<8x8xf32>, vector<8x8xf32>, vector<8x8xf32> -> vector<8x8xf32>
    %145 = arith.mulf %140, %135 : vector<8x1xf32>
    %cst_108 = arith.constant dense<0.000000e+00> : vector<8xf32>
    %146 = vector.multi_reduction <add>, %143, %cst_108 [1] : vector<8x8xf32> to vector<8xf32>
    %147 = vector.shape_cast %146 : vector<8xf32> to vector<8x1xf32>
    %148 = arith.addf %145, %147 : vector<8x1xf32>
    %c3_109 = arith.constant 3 : index
    %c0_110 = arith.constant 0 : index
    %c0_111 = arith.constant 0 : index
    %149 = vector.load %arg8[%c3_109, %c0_110, %c0_111] : memref<4x8x1xf32, #tpu.memory_space<vmem>>, vector<1x8x1xf32>
    %150 = vector.shape_cast %149 : vector<1x8x1xf32> to vector<8x1xf32>
    %151 = vector.shape_cast %148 : vector<8x1xf32> to vector<1x8x1xf32>
    tpu.vector_store %arg8[%c3_109, %c0_110, %c0_111], %151 {strides = array<i32>} : memref<4x8x1xf32, #tpu.memory_space<vmem>>, vector<1x8x1xf32>,
    %c3_112 = arith.constant 3 : index
    %c0_113 = arith.constant 0 : index
    %c0_114 = arith.constant 0 : index
    %152 = vector.load %arg9[%c3_112, %c0_113, %c0_114] : memref<4x8x8xf32, #tpu.memory_space<vmem>>, vector<1x8x8xf32>
    %153 = vector.shape_cast %152 : vector<1x8x8xf32> to vector<8x8xf32>
    %154 = vector.broadcast %140 : vector<8x1xf32> to vector<8x8xf32>
    %155 = arith.mulf %154, %153 : vector<8x8xf32>
    %156 = arith.addf %155, %144 : vector<8x8xf32>
    %c3_115 = arith.constant 3 : index
    %c0_116 = arith.constant 0 : index
    %c0_117 = arith.constant 0 : index
    %157 = vector.load %arg9[%c3_115, %c0_116, %c0_117] : memref<4x8x8xf32, #tpu.memory_space<vmem>>, vector<1x8x8xf32>
    %158 = vector.shape_cast %157 : vector<1x8x8xf32> to vector<8x8xf32>
    %159 = vector.shape_cast %156 : vector<8x8xf32> to vector<1x8x8xf32>
    tpu.vector_store %arg9[%c3_115, %c0_116, %c0_117], %159 {strides = array<i32>} : memref<4x8x8xf32, #tpu.memory_space<vmem>>, vector<1x8x8xf32>,
    %c3_118 = arith.constant 3 : index
    %c0_119 = arith.constant 0 : index
    %c0_120 = arith.constant 0 : index
    %160 = vector.load %arg7[%c3_118, %c0_119, %c0_120] : memref<4x8x1xf32, #tpu.memory_space<vmem>>, vector<1x8x1xf32>
    %161 = vector.shape_cast %160 : vector<1x8x1xf32> to vector<8x1xf32>
    %162 = vector.shape_cast %138 : vector<8x1xf32> to vector<1x8x1xf32>
    tpu.vector_store %arg7[%c3_118, %c0_119, %c0_120], %162 {strides = array<i32>} : memref<4x8x1xf32, #tpu.memory_space<vmem>>, vector<1x8x1xf32>,
    %c0_i32_121 = arith.constant 0 : i32
    %163 = arith.cmpi eq, %arg2, %c0_i32_121 : i32
    %164 = arith.extui %163 : i1 to i32
    %c0_i32_122 = arith.constant 0 : i32
    %165 = arith.cmpi ne, %164, %c0_i32_122 : i32
    scf.if %165 {
      %c0_123 = arith.constant 0 : index
      %c0_124 = arith.constant 0 : index
      %c0_125 = arith.constant 0 : index
      %166 = vector.load %arg8[%c0_123, %c0_124, %c0_125] : memref<4x8x1xf32, #tpu.memory_space<vmem>>, vector<1x8x1xf32>
      %167 = vector.shape_cast %166 : vector<1x8x1xf32> to vector<8x1xf32>
      %168 = tpu.reciprocal %167 {approx = true} : vector<8x1xf32> -> vector<8x1xf32>
      %c0_126 = arith.constant 0 : index
      %c0_127 = arith.constant 0 : index
      %c0_128 = arith.constant 0 : index
      %169 = vector.load %arg9[%c0_126, %c0_127, %c0_128] : memref<4x8x8xf32, #tpu.memory_space<vmem>>, vector<1x8x8xf32>
      %170 = vector.shape_cast %169 : vector<1x8x8xf32> to vector<8x8xf32>
      %171 = vector.broadcast %168 : vector<8x1xf32> to vector<8x8xf32>
      %172 = arith.mulf %170, %171 : vector<8x8xf32>
      %c0_129 = arith.constant 0 : index
      %c0_130 = arith.constant 0 : index
      %c0_131 = arith.constant 0 : index
      %173 = vector.load %arg6[%c0_129, %c0_130, %c0_131] : memref<1x8x32xf32, #tpu.memory_space<vmem>>, vector<1x8x8xf32>
      %174 = vector.shape_cast %173 : vector<1x8x8xf32> to vector<8x8xf32>
      %175 = vector.shape_cast %172 : vector<8x8xf32> to vector<1x8x8xf32>
      tpu.vector_store %arg6[%c0_129, %c0_130, %c0_131], %175 {strides = array<i32>} : memref<1x8x32xf32, #tpu.memory_space<vmem>>, vector<1x8x8xf32>,
      %c1_132 = arith.constant 1 : index
      %c0_133 = arith.constant 0 : index
      %c0_134 = arith.constant 0 : index
      %176 = vector.load %arg8[%c1_132, %c0_133, %c0_134] : memref<4x8x1xf32, #tpu.memory_space<vmem>>, vector<1x8x1xf32>
      %177 = vector.shape_cast %176 : vector<1x8x1xf32> to vector<8x1xf32>
      %178 = tpu.reciprocal %177 {approx = true} : vector<8x1xf32> -> vector<8x1xf32>
      %c1_135 = arith.constant 1 : index
      %c0_136 = arith.constant 0 : index
      %c0_137 = arith.constant 0 : index
      %179 = vector.load %arg9[%c1_135, %c0_136, %c0_137] : memref<4x8x8xf32, #tpu.memory_space<vmem>>, vector<1x8x8xf32>
      %180 = vector.shape_cast %179 : vector<1x8x8xf32> to vector<8x8xf32>
      %181 = vector.broadcast %178 : vector<8x1xf32> to vector<8x8xf32>
      %182 = arith.mulf %180, %181 : vector<8x8xf32>
      %c0_138 = arith.constant 0 : index
      %c0_139 = arith.constant 0 : index
      %c8_140 = arith.constant 8 : index
      %183 = vector.load %arg6[%c0_138, %c0_139, %c8_140] : memref<1x8x32xf32, #tpu.memory_space<vmem>>, vector<1x8x8xf32>
      %184 = vector.shape_cast %183 : vector<1x8x8xf32> to vector<8x8xf32>
      %185 = vector.shape_cast %182 : vector<8x8xf32> to vector<1x8x8xf32>
      tpu.vector_store %arg6[%c0_138, %c0_139, %c8_140], %185 {strides = array<i32>} : memref<1x8x32xf32, #tpu.memory_space<vmem>>, vector<1x8x8xf32>,
      %c2_141 = arith.constant 2 : index
      %c0_142 = arith.constant 0 : index
      %c0_143 = arith.constant 0 : index
      %186 = vector.load %arg8[%c2_141, %c0_142, %c0_143] : memref<4x8x1xf32, #tpu.memory_space<vmem>>, vector<1x8x1xf32>
      %187 = vector.shape_cast %186 : vector<1x8x1xf32> to vector<8x1xf32>
      %188 = tpu.reciprocal %187 {approx = true} : vector<8x1xf32> -> vector<8x1xf32>
      %c2_144 = arith.constant 2 : index
      %c0_145 = arith.constant 0 : index
      %c0_146 = arith.constant 0 : index
      %189 = vector.load %arg9[%c2_144, %c0_145, %c0_146] : memref<4x8x8xf32, #tpu.memory_space<vmem>>, vector<1x8x8xf32>
      %190 = vector.shape_cast %189 : vector<1x8x8xf32> to vector<8x8xf32>
      %191 = vector.broadcast %188 : vector<8x1xf32> to vector<8x8xf32>
      %192 = arith.mulf %190, %191 : vector<8x8xf32>
      %c0_147 = arith.constant 0 : index
      %c0_148 = arith.constant 0 : index
      %c16_149 = arith.constant 16 : index
      %193 = vector.load %arg6[%c0_147, %c0_148, %c16_149] : memref<1x8x32xf32, #tpu.memory_space<vmem>>, vector<1x8x8xf32>
      %194 = vector.shape_cast %193 : vector<1x8x8xf32> to vector<8x8xf32>
      %195 = vector.shape_cast %192 : vector<8x8xf32> to vector<1x8x8xf32>
      tpu.vector_store %arg6[%c0_147, %c0_148, %c16_149], %195 {strides = array<i32>} : memref<1x8x32xf32, #tpu.memory_space<vmem>>, vector<1x8x8xf32>,
      %c3_150 = arith.constant 3 : index
      %c0_151 = arith.constant 0 : index
      %c0_152 = arith.constant 0 : index
      %196 = vector.load %arg8[%c3_150, %c0_151, %c0_152] : memref<4x8x1xf32, #tpu.memory_space<vmem>>, vector<1x8x1xf32>
      %197 = vector.shape_cast %196 : vector<1x8x1xf32> to vector<8x1xf32>
      %198 = tpu.reciprocal %197 {approx = true} : vector<8x1xf32> -> vector<8x1xf32>
      %c3_153 = arith.constant 3 : index
      %c0_154 = arith.constant 0 : index
      %c0_155 = arith.constant 0 : index
      %199 = vector.load %arg9[%c3_153, %c0_154, %c0_155] : memref<4x8x8xf32, #tpu.memory_space<vmem>>, vector<1x8x8xf32>
      %200 = vector.shape_cast %199 : vector<1x8x8xf32> to vector<8x8xf32>
      %201 = vector.broadcast %198 : vector<8x1xf32> to vector<8x8xf32>
      %202 = arith.mulf %200, %201 : vector<8x8xf32>
      %c0_156 = arith.constant 0 : index
      %c0_157 = arith.constant 0 : index
      %c24_158 = arith.constant 24 : index
      %203 = vector.load %arg6[%c0_156, %c0_157, %c24_158] : memref<1x8x32xf32, #tpu.memory_space<vmem>>, vector<1x8x8xf32>
      %204 = vector.shape_cast %203 : vector<1x8x8xf32> to vector<8x8xf32>
      %205 = vector.shape_cast %202 : vector<8x8xf32> to vector<1x8x8xf32>
      tpu.vector_store %arg6[%c0_156, %c0_157, %c24_158], %205 {strides = array<i32>} : memref<1x8x32xf32, #tpu.memory_space<vmem>>, vector<1x8x8xf32>,
    } else {
    }
    return
  }
  func.func @transform_0(%arg0: i32, %arg1: i32, %arg2: i32) -> (i32, i32, i32) {
    %c0_i32 = arith.constant 0 : i32
    %c0_i32_0 = arith.constant 0 : i32
    return %arg0, %arg1, %c0_i32 : i32, i32, i32
  }
  func.func @transform_1(%arg0: i32, %arg1: i32, %arg2: i32) -> (i32, i32, i32) {
    %c0_i32 = arith.constant 0 : i32
    %c0_i32_0 = arith.constant 0 : i32
    return %arg0, %arg2, %c0_i32 : i32, i32, i32
  }
  func.func @transform_2(%arg0: i32, %arg1: i32, %arg2: i32) -> (i32, i32, i32) {
    %c0_i32 = arith.constant 0 : i32
    %c0_i32_0 = arith.constant 0 : i32
    return %arg0, %arg2, %c0_i32 : i32, i32, i32
  }
  func.func @transform_3(%arg0: i32, %arg1: i32, %arg2: i32) -> (i32, i32, i32) {
    %c0_i32 = arith.constant 0 : i32
    %c0_i32_0 = arith.constant 0 : i32
    return %arg0, %arg1, %c0_i32 : i32, i32, i32
  }
}

</mosaic_0001>

<llo_original>
// kernel: multi_header_self_attention.3
$region0: #{multi_header_self_attention.3}
  #allocation0 [shape = 'u32[]', space=smem, size = 0x4, offset = 0x4, fixed_abs, tag = 'smem constant byte address 0x4 - core index']
  #allocation1 [shape = 'u32[144,128]{1,0:T(1,128)}', space=vmem, size = 0x12000, scoped, tag = 'internal scratch']
  #allocation2 [shape = 'f32[16,96]{1,0:T(8,128)}', space=vmem, size = 0x2000, scoped, tag = 'scratch operand']
  %s0 = inlined_call_operand.vmem [shape: f32[16,32], index: 0, kind: input, shape index: {}]
  %s1 = inlined_call_operand.vmem [shape: f32[32,96], index: 1, kind: input, shape index: {}]
  %s2 = inlined_call_operand.vmem [shape: f32[1,96], index: 2, kind: input, shape index: {}]
  %s3 = inlined_call_operand.vmem [shape: f32[16,96], index: 3, kind: output, shape index: {}]
  %s4 = sld [smem:[#allocation0]]
  $region30: #{multi_header_self_attention.3} parent=0
    _
  %s6 = ssub.s32 1, %s4
  %s7 = scalar_select 0, %s6, %s4
  // Predicated region
  $region2: #{multi_header_self_attention.3} parent=0 // pred_check
    _
  $region3: #{multi_header_self_attention.3} parent=0 // pred_check_branch
    %9 = sbr.rel (0) target = $region5
  $region4: #{multi_header_self_attention.3} parent=0 // pred_region
    _
  $region5: #{multi_header_self_attention.3} parent=0 // pred_fallthru
    _
  // Predicated region
  $region6: #{multi_header_self_attention.3} parent=0 // pred_check
    _
  $region7: #{multi_header_self_attention.3} parent=0 // pred_check_branch
    %11 = sbr.rel (0) target = $region9
  $region8: #{multi_header_self_attention.3} parent=0 // pred_region
    _
  $region9: #{multi_header_self_attention.3} parent=0 // pred_fallthru
    _
  // Predicated region
  $region10: #{multi_header_self_attention.3} parent=0 // pred_check
    _
  $region11: #{multi_header_self_attention.3} parent=0 // pred_check_branch
    %13 = sbr.rel (0) target = $region13
  $region12: #{multi_header_self_attention.3} parent=0 // pred_region
    _
  $region13: #{multi_header_self_attention.3} parent=0 // pred_fallthru
    _
  %p14 = scmp.eq.s32.totalorder 0, 0
  // Predicated region
  $region14: #{multi_header_self_attention.3} parent=0 // pred_check
    %p15 = pneg %p14
  $region15: #{multi_header_self_attention.3} parent=0 // pred_check_branch
    %17 = sbr.rel (%p15) target = $region17
  $region16: #{multi_header_self_attention.3} parent=0 // pred_region
    %vm18 = vcmask 785408
    %19 = vst.msk [vmem:[#allocation2] sm:$0xff] %vm18, 0.0
    %20 = vst.msk [vmem:[#allocation2 + $0x8] sm:$0xff] %vm18, 0.0
  $region17: #{multi_header_self_attention.3} parent=0 // pred_fallthru
    _
  %v21 = vld [vmem:[#allocation2] sm:$0xff]
  %v22 = vld [vmem:[#allocation2 + $0x8] sm:$0xff]
  %v23 = vld [vmem:[%s0] sm:$0xff]
  %v24 = vld [vmem:[%s0 + $0x8] sm:$0xff]
  %v25 = vld [vmem:[%s1] sm:$0xff]
  %v26 = vld [vmem:[%s1 + $0x8] sm:$0xff]
  %v27 = vld [vmem:[%s1 + $0x10] sm:$0xff]
  %v28 = vld [vmem:[%s1 + $0x18] sm:$0xff]
  %vm29 = vcmask 261120
  %v31 = vsel %vm29, %v23, 0
  %v34 = vsel %vm29, %v24, 0
  %36 = vmatprep.subr.mxu0 0.0
  %37 = vmatpush1.msra.mxu0 %v25
  %38 = vmatprep.subr.mxu0 0.0
  %39 = vmatpush1.msra.mxu0 %v26
  %40 = vmatprep.subr.mxu0 0.0
  %41 = vmatpush1.msra.mxu0 %v27
  %42 = vmatprep.subr.mxu0 0.0
  %43 = vmatpush1.msra.mxu0 %v28
  %44 = vmatprep.subr.mxu0 0.0
  %45 = vmatpush1.msra.mxu0 0.0
  %46 = vmatprep.subr.mxu0 0.0
  %47 = vmatpush1.msra.mxu0 0.0
  %48 = vmatprep.subr.mxu0 0.0
  %49 = vmatpush1.msra.mxu0 0.0
  %50 = vmatprep.subr.mxu0 0.0
  %51 = vmatpush1.msra.mxu0 0.0
  %52 = vmatprep.subr.mxu0 0.0
  %53 = vmatpush1.msra.mxu0 0.0
  %54 = vmatprep.subr.mxu0 0.0
  %55 = vmatpush1.msra.mxu0 0.0
  %56 = vmatprep.subr.mxu0 0.0
  %57 = vmatpush1.msra.mxu0 0.0
  %58 = vmatprep.subr.mxu0 0.0
  %59 = vmatpush1.msra.mxu0 0.0
  %60 = vmatprep.subr.mxu0 0.0
  %61 = vmatpush1.msra.mxu0 0.0
  %62 = vmatprep.subr.mxu0 0.0
  %63 = vmatpush1.msra.mxu0 0.0
  %64 = vmatprep.subr.mxu0 0.0
  %65 = vmatpush1.msra.mxu0 0.0
  %66 = vmatprep.subr.mxu0 0.0
  %67 = vmatpush1.msra.mxu0 0.0
  %68 = vmatprep.subr.mxu0 0.0
  %69 = vmatpush1.msra.mxu0 0.0
  %70 = vmatprep.subr.mxu0 0.0
  %71 = vmatpush1.msra.mxu0 0.0
  %72 = vmatprep.subr.mxu0 0.0
  %73 = vmatpush1.msra.mxu0 0.0
  %74 = vmatprep.subr.mxu0 0.0
  %75 = vmatpush1.msra.mxu0 0.0
  %76 = vmatprep.subr.mxu0 0.0
  %77 = vmatpush1.msra.mxu0 0.0
  %78 = vmatprep.subr.mxu0 0.0
  %79 = vmatpush1.msra.mxu0 0.0
  %80 = vmatprep.subr.mxu0 0.0
  %81 = vmatpush1.msra.mxu0 0.0
  %82 = vmatprep.subr.mxu0 0.0
  %83 = vmatpush1.msra.mxu0 0.0
  %84 = vmatprep.subr.mxu0 0.0
  %85 = vmatpush1.msra.mxu0 0.0
  %86 = vmatprep.subr.mxu0 0.0
  %87 = vmatpush1.msra.mxu0 0.0
  %88 = vmatprep.subr.mxu0 0.0
  %89 = vmatpush1.msra.mxu0 0.0
  %90 = vmatprep.subr.mxu0 0.0
  %91 = vmatpush1.msra.mxu0 0.0
  %92 = vmatprep.subr.mxu0 0.0
  %93 = vmatpush1.msra.mxu0 0.0
  %94 = vmatprep.subr.mxu0 0.0
  %95 = vmatpush1.msra.mxu0 0.0
  %96 = vmatprep.subr.mxu0 0.0
  %97 = vmatpush1.msra.mxu0 0.0
  %98 = vmatprep.subr.mxu0 0.0
  %99 = vmatpush1.msra.mxu0 0.0
  %100 = vmatprep.mubr.f32.mxu0 0.0
  %101 = vmatmul.mubr.f32.gmra.mrb[0].mxu0 %v31
  %v102 = vpop.f32.mrb[0].mxu0
  %v103 = vadd.f32 0.0, %v102
  %v104 = vpop.f32.mrb[0].mxu0
  %105 = vmatprep.mubr.f32.mxu0 0.0
  %106 = vmatmul.mubr.f32.gmra.mrb[0].mxu0 %v34
  %v107 = vpop.f32.mrb[0].mxu0
  %v108 = vadd.f32 0.0, %v107
  %v109 = vpop.f32.mrb[0].mxu0
  %110 = vdwg.mxu0
  %v111 = vadd.f32 %v21, %v103
  %v112 = vadd.f32 %v22, %v108
  %vm113 = vcmask 785408
  %114 = vst.msk [vmem:[#allocation2] sm:$0xff] %vm113, %v111
  %115 = vst.msk [vmem:[#allocation2 + $0x8] sm:$0xff] %vm113, %v112
  // Predicated region
  $region18: #{multi_header_self_attention.3} parent=0 // pred_check
    %p116 = pneg %p14
  $region19: #{multi_header_self_attention.3} parent=0 // pred_check_branch
    %118 = sbr.rel (%p116) target = $region21
  $region20: #{multi_header_self_attention.3} parent=0 // pred_region
    %v119 = vld [vmem:[#allocation2] sm:$0xff]
    %v120 = vld [vmem:[#allocation2 + $0x8] sm:$0xff]
    %v121 = vld [vmem:[%s2] sm:$0x1]
    %v123 = vlaneseq
    %v124 = vshrl.u32 %v123, 7
    %v125 = vsub.s32 0, %v124
    %v126 = vrot.slane %v121, %v125
    %v128 = vadd.f32 %v119, %v126
    %v129 = vadd.f32 %v120, %v126
    %130 = vst.msk [vmem:[%s3] sm:$0xff] %vm113, %v128
    %131 = vst.msk [vmem:[%s3 + $0x8] sm:$0xff] %vm113, %v129
  $region21: #{multi_header_self_attention.3} parent=0 // pred_fallthru
    _
  // Predicated region
  $region22: #{multi_header_self_attention.3} parent=0 // pred_check
    _
  $region23: #{multi_header_self_attention.3} parent=0 // pred_check_branch
    %133 = sbr.rel (0) target = $region25
  $region24: #{multi_header_self_attention.3} parent=0 // pred_region
    _
  $region25: #{multi_header_self_attention.3} parent=0 // pred_fallthru
    _
  // Predicated region
  $region26: #{multi_header_self_attention.3} parent=0 // pred_check
    _
  $region27: #{multi_header_self_attention.3} parent=0 // pred_check_branch
    %135 = sbr.rel (0) target = $region29
  $region28: #{multi_header_self_attention.3} parent=0 // pred_region
    _
  $region29: #{multi_header_self_attention.3} parent=0 // pred_fallthru
    _

// kernel: multi_header_self_attention.5
$region0: #{multi_header_self_attention.5}
  #allocation0 [shape = 'u32[]', space=smem, size = 0x4, offset = 0x4, fixed_abs, tag = 'smem constant byte address 0x4 - core index']
  #allocation1 [shape = 'u32[144,128]{1,0:T(1,128)}', space=vmem, size = 0x12000, scoped, tag = 'internal scratch']
  #allocation2 [shape = 'f32[16,32]{1,0:T(8,128)}', space=vmem, size = 0x2000, scoped, tag = 'scratch operand']
  %s0 = inlined_call_operand.vmem [shape: f32[16,32], index: 0, kind: input, shape index: {}]
  %s1 = inlined_call_operand.vmem [shape: f32[32,32], index: 1, kind: input, shape index: {}]
  %s2 = inlined_call_operand.vmem [shape: f32[1,32], index: 2, kind: input, shape index: {}]
  %s3 = inlined_call_operand.hbm [shape: f32[16,32], index: 3, kind: output, shape index: {}]
  %s4 = sld [smem:[#allocation0]]
  $region30: #{multi_header_self_attention.5} parent=0
    _
  %s6 = ssub.s32 1, %s4
  %s7 = scalar_select 0, %s6, %s4
  $region1: #{multi_header_self_attention.5} parent=0
    #allocation3 [shape = 'u8[8192]{0}', space=vmem, size = 0x2000, scoped, tag = 'output window, operand 0, single buffered']
    #allocation4 [shape = 's32[1]{0}', space=sflag, size = 0x4, scoped, tag = 'scoped memory for multi_header_self_attention.5']
    %8 = vsyncpa [#allocation4], 0
    // Predicated region
    $region2: #{multi_header_self_attention.5} parent=1 // pred_check
      _
    $region3: #{multi_header_self_attention.5} parent=1 // pred_check_branch
      %10 = sbr.rel (0) target = $region5
    $region4: #{multi_header_self_attention.5} parent=1 // pred_region
      _
    $region5: #{multi_header_self_attention.5} parent=1 // pred_fallthru
      _
    // Predicated region
    $region6: #{multi_header_self_attention.5} parent=1 // pred_check
      _
    $region7: #{multi_header_self_attention.5} parent=1 // pred_check_branch
      %12 = sbr.rel (0) target = $region9
    $region8: #{multi_header_self_attention.5} parent=1 // pred_region
      _
    $region9: #{multi_header_self_attention.5} parent=1 // pred_fallthru
      _
    // Predicated region
    $region10: #{multi_header_self_attention.5} parent=1 // pred_check
      _
    $region11: #{multi_header_self_attention.5} parent=1 // pred_check_branch
      %14 = sbr.rel (0) target = $region13
    $region12: #{multi_header_self_attention.5} parent=1 // pred_region
      _
    $region13: #{multi_header_self_attention.5} parent=1 // pred_fallthru
      _
    %p15 = scmp.eq.s32.totalorder 0, 0
    // Predicated region
    $region14: #{multi_header_self_attention.5} parent=1 // pred_check
      %p16 = pneg %p15
    $region15: #{multi_header_self_attention.5} parent=1 // pred_check_branch
      %18 = sbr.rel (%p16) target = $region17
    $region16: #{multi_header_self_attention.5} parent=1 // pred_region
      %vm19 = vcmask 261120
      %20 = vst.msk [vmem:[#allocation2] sm:$0xff] %vm19, 0.0
      %21 = vst.msk [vmem:[#allocation2 + $0x8] sm:$0xff] %vm19, 0.0
    $region17: #{multi_header_self_attention.5} parent=1 // pred_fallthru
      _
    %v22 = vld [vmem:[#allocation2] sm:$0xff]
    %v23 = vld [vmem:[#allocation2 + $0x8] sm:$0xff]
    %v24 = vld [vmem:[%s0] sm:$0xff]
    %v25 = vld [vmem:[%s0 + $0x8] sm:$0xff]
    %v26 = vld [vmem:[%s1] sm:$0xff]
    %v27 = vld [vmem:[%s1 + $0x8] sm:$0xff]
    %v28 = vld [vmem:[%s1 + $0x10] sm:$0xff]
    %v29 = vld [vmem:[%s1 + $0x18] sm:$0xff]
    %vm30 = vcmask 261120
    %v32 = vsel %vm30, %v24, 0
    %v35 = vsel %vm30, %v25, 0
    %37 = vmatprep.subr.mxu0 0.0
    %38 = vmatpush1.msra.mxu0 %v26
    %39 = vmatprep.subr.mxu0 0.0
    %40 = vmatpush1.msra.mxu0 %v27
    %41 = vmatprep.subr.mxu0 0.0
    %42 = vmatpush1.msra.mxu0 %v28
    %43 = vmatprep.subr.mxu0 0.0
    %44 = vmatpush1.msra.mxu0 %v29
    %45 = vmatprep.subr.mxu0 0.0
    %46 = vmatpush1.msra.mxu0 0.0
    %47 = vmatprep.subr.mxu0 0.0
    %48 = vmatpush1.msra.mxu0 0.0
    %49 = vmatprep.subr.mxu0 0.0
    %50 = vmatpush1.msra.mxu0 0.0
    %51 = vmatprep.subr.mxu0 0.0
    %52 = vmatpush1.msra.mxu0 0.0
    %53 = vmatprep.subr.mxu0 0.0
    %54 = vmatpush1.msra.mxu0 0.0
    %55 = vmatprep.subr.mxu0 0.0
    %56 = vmatpush1.msra.mxu0 0.0
    %57 = vmatprep.subr.mxu0 0.0
    %58 = vmatpush1.msra.mxu0 0.0
    %59 = vmatprep.subr.mxu0 0.0
    %60 = vmatpush1.msra.mxu0 0.0
    %61 = vmatprep.subr.mxu0 0.0
    %62 = vmatpush1.msra.mxu0 0.0
    %63 = vmatprep.subr.mxu0 0.0
    %64 = vmatpush1.msra.mxu0 0.0
    %65 = vmatprep.subr.mxu0 0.0
    %66 = vmatpush1.msra.mxu0 0.0
    %67 = vmatprep.subr.mxu0 0.0
    %68 = vmatpush1.msra.mxu0 0.0
    %69 = vmatprep.subr.mxu0 0.0
    %70 = vmatpush1.msra.mxu0 0.0
    %71 = vmatprep.subr.mxu0 0.0
    %72 = vmatpush1.msra.mxu0 0.0
    %73 = vmatprep.subr.mxu0 0.0
    %74 = vmatpush1.msra.mxu0 0.0
    %75 = vmatprep.subr.mxu0 0.0
    %76 = vmatpush1.msra.mxu0 0.0
    %77 = vmatprep.subr.mxu0 0.0
    %78 = vmatpush1.msra.mxu0 0.0
    %79 = vmatprep.subr.mxu0 0.0
    %80 = vmatpush1.msra.mxu0 0.0
    %81 = vmatprep.subr.mxu0 0.0
    %82 = vmatpush1.msra.mxu0 0.0
    %83 = vmatprep.subr.mxu0 0.0
    %84 = vmatpush1.msra.mxu0 0.0
    %85 = vmatprep.subr.mxu0 0.0
    %86 = vmatpush1.msra.mxu0 0.0
    %87 = vmatprep.subr.mxu0 0.0
    %88 = vmatpush1.msra.mxu0 0.0
    %89 = vmatprep.subr.mxu0 0.0
    %90 = vmatpush1.msra.mxu0 0.0
    %91 = vmatprep.subr.mxu0 0.0
    %92 = vmatpush1.msra.mxu0 0.0
    %93 = vmatprep.subr.mxu0 0.0
    %94 = vmatpush1.msra.mxu0 0.0
    %95 = vmatprep.subr.mxu0 0.0
    %96 = vmatpush1.msra.mxu0 0.0
    %97 = vmatprep.subr.mxu0 0.0
    %98 = vmatpush1.msra.mxu0 0.0
    %99 = vmatprep.subr.mxu0 0.0
    %100 = vmatpush1.msra.mxu0 0.0
    %101 = vmatprep.mubr.f32.mxu0 0.0
    %102 = vmatmul.mubr.f32.gmra.mrb[0].mxu0 %v32
    %v103 = vpop.f32.mrb[0].mxu0
    %v104 = vadd.f32 0.0, %v103
    %v105 = vpop.f32.mrb[0].mxu0
    %106 = vmatprep.mubr.f32.mxu0 0.0
    %107 = vmatmul.mubr.f32.gmra.mrb[0].mxu0 %v35
    %v108 = vpop.f32.mrb[0].mxu0
    %v109 = vadd.f32 0.0, %v108
    %v110 = vpop.f32.mrb[0].mxu0
    %111 = vdwg.mxu0
    %v112 = vadd.f32 %v22, %v104
    %v113 = vadd.f32 %v23, %v109
    %114 = vst.msk [vmem:[#allocation2] sm:$0xff] %vm30, %v112
    %115 = vst.msk [vmem:[#allocation2 + $0x8] sm:$0xff] %vm30, %v113
    // Predicated region
    $region18: #{multi_header_self_attention.5} parent=1 // pred_check
      %p116 = pneg %p15
    $region19: #{multi_header_self_attention.5} parent=1 // pred_check_branch
      %118 = sbr.rel (%p116) target = $region21
    $region20: #{multi_header_self_attention.5} parent=1 // pred_region
      %v119 = vld [vmem:[#allocation2] sm:$0xff]
      %v120 = vld [vmem:[#allocation2 + $0x8] sm:$0xff]
      %v121 = vld [vmem:[%s2] sm:$0x1]
      %v123 = vlaneseq
      %v124 = vshrl.u32 %v123, 7
      %v125 = vsub.s32 0, %v124
      %v126 = vrot.slane %v121, %v125
      %v128 = vadd.f32 %v119, %v126
      %v129 = vadd.f32 %v120, %v126
      %130 = vst.msk [vmem:[#allocation3] sm:$0xff] %vm30, %v128
      %131 = vst.msk [vmem:[#allocation3 + $0x8] sm:$0xff] %vm30, %v129
    $region21: #{multi_header_self_attention.5} parent=1 // pred_fallthru
      _
    // Predicated region
    $region22: #{multi_header_self_attention.5} parent=1 // pred_check
      _
    $region23: #{multi_header_self_attention.5} parent=1 // pred_check_branch
      %133 = sbr.rel (0) target = $region25
    $region24: #{multi_header_self_attention.5} parent=1 // pred_region
      %s135 = ssub.s32 256, 256
      %136 = vsyncadd [#allocation4], %s135
      %s137 = sshll.u32 [#allocation3], 4
      %s138 = int_to_ptr.vmem [resolvable:$true] %s137
      %143 = dma.vmem_to_hbm [thread:$0]  %s138, 256, %s3, [#allocation4], 128, 128, 8
    $region25: #{multi_header_self_attention.5} parent=1 // pred_fallthru
      _
    // Predicated region
    $region26: #{multi_header_self_attention.5} parent=1 // pred_check
      _
    $region27: #{multi_header_self_attention.5} parent=1 // pred_check_branch
      %145 = sbr.rel (0) target = $region29
    $region28: #{multi_header_self_attention.5} parent=1 // pred_region
      %146 = dma.done [#allocation4], 256
    $region29: #{multi_header_self_attention.5} parent=1 // pred_fallthru
      _
    %147 = vsyncpa [#allocation4], 1

// kernel: multi_header_self_attention.4
$region0: #{multi_header_self_attention.4}
  #allocation0 [shape = 'u32[]', space=smem, size = 0x4, offset = 0x4, fixed_abs, tag = 'smem constant byte address 0x4 - core index']
  #allocation1 [shape = 'u32[144,128]{1,0:T(1,128)}', space=vmem, size = 0x12000, scoped, tag = 'internal scratch']
  #allocation2 [shape = 'f32[4,8,1]{2,1,0:T(8,128)}', space=vmem, size = 0x4000, scoped, tag = 'scratch operand']
  #allocation3 [shape = 'f32[4,8,1]{2,1,0:T(8,128)}', space=vmem, size = 0x4000, scoped, tag = 'scratch operand']
  #allocation4 [shape = 'f32[4,8,8]{2,1,0:T(8,128)}', space=vmem, size = 0x4000, scoped, tag = 'scratch operand']
  %s0 = inlined_call_operand.vmem [shape: f32[2,8,32], index: 0, kind: input, shape index: {}]
  %s1 = inlined_call_operand.vmem [shape: f32[2,8,32], index: 1, kind: input, shape index: {}]
  %s2 = inlined_call_operand.vmem [shape: f32[2,8,32], index: 2, kind: input, shape index: {}]
  %s3 = inlined_call_operand.vmem [shape: f32[2,8,32], index: 3, kind: output, shape index: {}]
  %s4 = sld [smem:[#allocation0]]
  $region53: #{multi_header_self_attention.4} parent=0
    _
  %s6 = ssub.s32 1, %s4
  %s7 = scalar_select 0, %s6, %s4
  loop: start=0, step=1, limit=4
  $region2: #{multi_header_self_attention.4} parent=0 // loop_pre_header
    _
  $region3: #{multi_header_self_attention.4} parent=0 // loop_header
    %s9 = sphi 0, %s13
    %p10 = scmp.ge.s32.totalorder %s9, 4
    %s16 = sphi 0, %s35
    %s17 = sphi 0, %s31
    %s18 = sphi 0, %s27
    %s19 = sphi 0, %s16
    %s20 = sphi 0, %s17
    %s21 = sphi 0, %s18
    %s22 = sphi 0, %s19
    %s23 = sphi 0, %s20
    %s24 = sphi 0, %s21
    %s40 = sphi 0, %s42
    %s43 = sphi 0, %s40
    %s44 = sphi 0, %s43
    %s60 = sphi 0, %s44
    %s68 = sphi 0, %s70
    %s71 = sphi 0, %s68
    %s72 = sphi 0, %s71
    %s88 = sphi 0, %s72
    %s96 = sphi 0, %s98
    %s99 = sphi 0, %s96
    %s100 = sphi 0, %s99
    %s116 = sphi 0, %s100
    %s124 = sphi 0, %s126
    %s127 = sphi 0, %s124
    %s128 = sphi 0, %s127
    %s144 = sphi 0, %s128
  $region4: #{multi_header_self_attention.4} parent=0 // loop_header_branch
    %12 = sbr.rel (%p10) target = $region8
  $region5: #{multi_header_self_attention.4} parent=0 // loop_body
    %s14 = ssub.s32 %s9, 1
    %s15 = ssub.s32 %s9, 2
    %s25 = sadd.s32 1, %s18
    %p26 = scmp.ge.s32.totalorder %s25, 1
    %s27 = scalar_select %p26, 0, %s25
    %s28 = sadd.s32 1, %s17
    %s29 = scalar_select %p26, %s28, %s17
    %p30 = scmp.ge.s32.totalorder %s29, 1
    %s31 = scalar_select %p30, 0, %s29
    %s32 = sadd.s32 1, %s16
    %s33 = scalar_select %p30, %s32, %s16
    %p34 = scmp.ge.s32.totalorder %s33, 2
    %s35 = scalar_select %p34, 0, %s33
    %s36 = ssub.s32 %s16, %s35
    %s37 = ssub.s32 %s17, %s31
    %s38 = sor.u32 %s36, %s37
    %p39 = scmp.eq.s32.totalorder %s38, 0
    %s41 = sadd.s32 %s40, 1
    %s42 = scalar_select %p39, %s40, %s41
    %p45 = pneg %p39
    %p46 = scmp.eq.s32.totalorder %s9, 1
    %p47 = por %p45, %p46
    %p48 = scmp.ne.s32.totalorder %s40, %s43
    %p49 = scmp.eq.s32.totalorder %s9, 0
    %p50 = por %p48, %p49
    %p51 = scmp.ne.s32.totalorder %s40, %s43
    %p52 = scmp.eq.s32.totalorder %s14, 1
    %p53 = por %p51, %p52
    %p54 = scmp.ne.s32.totalorder %s43, %s44
    %p55 = scmp.eq.s32.totalorder %s14, 0
    %p56 = por %p54, %p55
    %p57 = scmp.ne.s32.totalorder %s43, %s44
    %p58 = scmp.eq.s32.totalorder %s15, 1
    %p59 = por %p57, %p58
    %p61 = scmp.ne.s32.totalorder %s44, %s60
    %p62 = scmp.eq.s32.totalorder %s15, 0
    %p63 = por %p61, %p62
    %s64 = ssub.s32 %s16, %s35
    %s65 = ssub.s32 %s18, %s27
    %s66 = sor.u32 %s64, %s65
    %p67 = scmp.eq.s32.totalorder %s66, 0
    %s69 = sadd.s32 %s68, 1
    %s70 = scalar_select %p67, %s68, %s69
    %p73 = pneg %p67
    %p74 = scmp.eq.s32.totalorder %s9, 1
    %p75 = por %p73, %p74
    %p76 = scmp.ne.s32.totalorder %s68, %s71
    %p77 = scmp.eq.s32.totalorder %s9, 0
    %p78 = por %p76, %p77
    %p79 = scmp.ne.s32.totalorder %s68, %s71
    %p80 = scmp.eq.s32.totalorder %s14, 1
    %p81 = por %p79, %p80
    %p82 = scmp.ne.s32.totalorder %s71, %s72
    %p83 = scmp.eq.s32.totalorder %s14, 0
    %p84 = por %p82, %p83
    %p85 = scmp.ne.s32.totalorder %s71, %s72
    %p86 = scmp.eq.s32.totalorder %s15, 1
    %p87 = por %p85, %p86
    %p89 = scmp.ne.s32.totalorder %s72, %s88
    %p90 = scmp.eq.s32.totalorder %s15, 0
    %p91 = por %p89, %p90
    %s92 = ssub.s32 %s16, %s35
    %s93 = ssub.s32 %s18, %s27
    %s94 = sor.u32 %s92, %s93
    %p95 = scmp.eq.s32.totalorder %s94, 0
    %s97 = sadd.s32 %s96, 1
    %s98 = scalar_select %p95, %s96, %s97
    %p101 = pneg %p95
    %p102 = scmp.eq.s32.totalorder %s9, 1
    %p103 = por %p101, %p102
    %p104 = scmp.ne.s32.totalorder %s96, %s99
    %p105 = scmp.eq.s32.totalorder %s9, 0
    %p106 = por %p104, %p105
    %p107 = scmp.ne.s32.totalorder %s96, %s99
    %p108 = scmp.eq.s32.totalorder %s14, 1
    %p109 = por %p107, %p108
    %p110 = scmp.ne.s32.totalorder %s99, %s100
    %p111 = scmp.eq.s32.totalorder %s14, 0
    %p112 = por %p110, %p111
    %p113 = scmp.ne.s32.totalorder %s99, %s100
    %p114 = scmp.eq.s32.totalorder %s15, 1
    %p115 = por %p113, %p114
    %p117 = scmp.ne.s32.totalorder %s100, %s116
    %p118 = scmp.eq.s32.totalorder %s15, 0
    %p119 = por %p117, %p118
    %s120 = ssub.s32 %s16, %s35
    %s121 = ssub.s32 %s17, %s31
    %s122 = sor.u32 %s120, %s121
    %p123 = scmp.eq.s32.totalorder %s122, 0
    %s125 = sadd.s32 %s124, 1
    %s126 = scalar_select %p123, %s124, %s125
    %p129 = pneg %p123
    %p130 = scmp.eq.s32.totalorder %s9, 1
    %p131 = por %p129, %p130
    %p132 = scmp.ne.s32.totalorder %s124, %s127
    %p133 = scmp.eq.s32.totalorder %s9, 0
    %p134 = por %p132, %p133
    %p135 = scmp.ne.s32.totalorder %s124, %s127
    %p136 = scmp.eq.s32.totalorder %s14, 1
    %p137 = por %p135, %p136
    %p138 = scmp.ne.s32.totalorder %s127, %s128
    %p139 = scmp.eq.s32.totalorder %s14, 0
    %p140 = por %p138, %p139
    %p141 = scmp.ne.s32.totalorder %s127, %s128
    %p142 = scmp.eq.s32.totalorder %s15, 1
    %p143 = por %p141, %p142
    %p145 = scmp.ne.s32.totalorder %s128, %s144
    %p146 = scmp.eq.s32.totalorder %s15, 0
    %p147 = por %p145, %p146
    %p148 = scmp.le.s32.totalorder 1, %s9
    %p149 = scmp.lt.s32.totalorder %s9, 3
    %p150 = pnand %p148, %p149
    %p151 = pneg %p150
    // Predicated region
    $region9: #{multi_header_self_attention.4} parent=5 // pred_check
      _
    $region10: #{multi_header_self_attention.4} parent=5 // pred_check_branch
      %153 = sbr.rel (%p150) target = $region12
    $region11: #{multi_header_self_attention.4} parent=5 // pred_region
      %s154 = ssub.s32 %s9, 1
    $region12: #{multi_header_self_attention.4} parent=5 // pred_fallthru
      _
    %p155 = scmp.lt.s32.totalorder %s9, 2
    // Predicated region
    $region13: #{multi_header_self_attention.4} parent=5 // pred_check
      %p156 = pneg %p155
    $region14: #{multi_header_self_attention.4} parent=5 // pred_check_branch
      %158 = sbr.rel (%p156) target = $region16
    $region15: #{multi_header_self_attention.4} parent=5 // pred_region
      // Predicated region
      $region17: #{multi_header_self_attention.4} parent=15 // pred_check
        %p159 = pneg %p50
      $region18: #{multi_header_self_attention.4} parent=15 // pred_check_branch
        %161 = sbr.rel (%p159) target = $region20
      $region19: #{multi_header_self_attention.4} parent=15 // pred_region
        %p162 = scmp.lt.s32.totalorder %s16, 1
        %s163 = scalar_select %p162, %s16, 1
        %p164 = scmp.lt.s32.totalorder %s17, 0
        %s165 = scalar_select %p164, %s17, 0
        %s166 = sadd.s32 %s165, %s163
        %s167 = smul.addr %s166, 8
        %s168 = scalar_lea.vmem %s0, %s167
      $region20: #{multi_header_self_attention.4} parent=15 // pred_fallthru
        _
      // Predicated region
      $region21: #{multi_header_self_attention.4} parent=15 // pred_check
        %p169 = pneg %p78
      $region22: #{multi_header_self_attention.4} parent=15 // pred_check_branch
        %171 = sbr.rel (%p169) target = $region24
      $region23: #{multi_header_self_attention.4} parent=15 // pred_region
        %p172 = scmp.lt.s32.totalorder %s16, 1
        %s173 = scalar_select %p172, %s16, 1
        %p174 = scmp.lt.s32.totalorder %s18, 0
        %s175 = scalar_select %p174, %s18, 0
        %s176 = sadd.s32 %s175, %s173
        %s177 = smul.addr %s176, 8
        %s178 = scalar_lea.vmem %s1, %s177
      $region24: #{multi_header_self_attention.4} parent=15 // pred_fallthru
        _
      // Predicated region
      $region25: #{multi_header_self_attention.4} parent=15 // pred_check
        %p179 = pneg %p106
      $region26: #{multi_header_self_attention.4} parent=15 // pred_check_branch
        %181 = sbr.rel (%p179) target = $region28
      $region27: #{multi_header_self_attention.4} parent=15 // pred_region
        %p182 = scmp.lt.s32.totalorder %s16, 1
        %s183 = scalar_select %p182, %s16, 1
        %p184 = scmp.lt.s32.totalorder %s18, 0
        %s185 = scalar_select %p184, %s18, 0
        %s186 = sadd.s32 %s185, %s183
        %s187 = smul.addr %s186, 8
        %s188 = scalar_lea.vmem %s2, %s187
      $region28: #{multi_header_self_attention.4} parent=15 // pred_fallthru
        _
    $region16: #{multi_header_self_attention.4} parent=5 // pred_fallthru
      _
    %p189 = scmp.le.s32.totalorder 1, %s9
    %p190 = scmp.lt.s32.totalorder %s9, 3
    %p191 = pnand %p189, %p190
    %p192 = pneg %p191
    // Predicated region
    $region29: #{multi_header_self_attention.4} parent=5 // pred_check
      _
    $region30: #{multi_header_self_attention.4} parent=5 // pred_check_branch
      %194 = sbr.rel (%p191) target = $region32
    $region31: #{multi_header_self_attention.4} parent=5 // pred_region
      %s195 = ssub.s32 %s9, 1
      %p196 = scmp.lt.s32.totalorder %s19, 1
      %s197 = scalar_select %p196, %s19, 1
      %p198 = scmp.lt.s32.totalorder %s20, 0
      %s199 = scalar_select %p198, %s20, 0
      %s200 = sadd.s32 %s199, %s197
      %s201 = smul.addr %s200, 8
      %s202 = scalar_lea.vmem %s0, %s201
      %p203 = pneg %p56
      %p204 = pneg %p53
      %p205 = scmp.lt.s32.totalorder %s19, 1
      %s206 = scalar_select %p205, %s19, 1
      %p207 = scmp.lt.s32.totalorder %s21, 0
      %s208 = scalar_select %p207, %s21, 0
      %s209 = sadd.s32 %s208, %s206
      %s210 = smul.addr %s209, 8
      %s211 = scalar_lea.vmem %s1, %s210
      %p212 = pneg %p84
      %p213 = pneg %p81
      %p214 = scmp.lt.s32.totalorder %s19, 1
      %s215 = scalar_select %p214, %s19, 1
      %p216 = scmp.lt.s32.totalorder %s21, 0
      %s217 = scalar_select %p216, %s21, 0
      %s218 = sadd.s32 %s217, %s215
      %s219 = smul.addr %s218, 8
      %s220 = scalar_lea.vmem %s2, %s219
      %p221 = pneg %p112
      %p222 = pneg %p109
      %p223 = pneg %p140
      %p224 = pneg %p137
      %p225 = scmp.lt.s32.totalorder %s19, 1
      %s226 = scalar_select %p225, %s19, 1
      %p227 = scmp.lt.s32.totalorder %s20, 0
      %s228 = scalar_select %p227, %s20, 0
      %s229 = sadd.s32 %s228, %s226
      %s230 = smul.addr %s229, 8
      %s231 = scalar_lea.vmem %s3, %s230
      %p232 = scmp.lt.s32.totalorder %s19, 1
      %s233 = scalar_select %p232, %s19, 1
      %p234 = scmp.lt.s32.totalorder %s20, 0
      %s235 = scalar_select %p234, %s20, 0
      %s236 = sadd.s32 %s235, %s233
      %s237 = smul.addr %s236, 8
      %s238 = scalar_lea.vmem %s0, %s237
      %p239 = scmp.lt.s32.totalorder %s19, 1
      %s240 = scalar_select %p239, %s19, 1
      %p241 = scmp.lt.s32.totalorder %s21, 0
      %s242 = scalar_select %p241, %s21, 0
      %s243 = sadd.s32 %s242, %s240
      %s244 = smul.addr %s243, 8
      %s245 = scalar_lea.vmem %s1, %s244
      %p246 = scmp.lt.s32.totalorder %s19, 1
      %s247 = scalar_select %p246, %s19, 1
      %p248 = scmp.lt.s32.totalorder %s21, 0
      %s249 = scalar_select %p248, %s21, 0
      %s250 = sadd.s32 %s249, %s247
      %s251 = smul.addr %s250, 8
      %s252 = scalar_lea.vmem %s2, %s251
      %p253 = scmp.lt.s32.totalorder %s19, 1
      %s254 = scalar_select %p253, %s19, 1
      %p255 = scmp.lt.s32.totalorder %s20, 0
      %s256 = scalar_select %p255, %s20, 0
      %s257 = sadd.s32 %s256, %s254
      %s258 = smul.addr %s257, 8
      %s259 = scalar_lea.vmem %s3, %s258
      %p260 = scmp.eq.s32.totalorder %s21, 0
      // Predicated region
      $region33: #{multi_header_self_attention.4} parent=31 // pred_check
        %p261 = pneg %p260
      $region34: #{multi_header_self_attention.4} parent=31 // pred_check_branch
        %263 = sbr.rel (%p261) target = $region36
      $region35: #{multi_header_self_attention.4} parent=31 // pred_region
        %vm264 = vcmask 7168
        %265 = vst.msk [vmem:[#allocation2] sm:$0xff] %vm264, -inf
        %266 = vst.msk [vmem:[#allocation2 + $0x8] sm:$0xff] %vm264, -inf
        %267 = vst.msk [vmem:[#allocation2 + $0x10] sm:$0xff] %vm264, -inf
        %268 = vst.msk [vmem:[#allocation2 + $0x18] sm:$0xff] %vm264, -inf
        %269 = vst.msk [vmem:[#allocation3] sm:$0xff] %vm264, 0.0
        %270 = vst.msk [vmem:[#allocation3 + $0x8] sm:$0xff] %vm264, 0.0
        %271 = vst.msk [vmem:[#allocation3 + $0x10] sm:$0xff] %vm264, 0.0
        %272 = vst.msk [vmem:[#allocation3 + $0x18] sm:$0xff] %vm264, 0.0
        %vm273 = vcmask 64512
        %274 = vst.msk [vmem:[#allocation4] sm:$0xff] %vm273, 0.0
        %275 = vst.msk [vmem:[#allocation4 + $0x8] sm:$0xff] %vm273, 0.0
        %276 = vst.msk [vmem:[#allocation4 + $0x10] sm:$0xff] %vm273, 0.0
        %277 = vst.msk [vmem:[#allocation4 + $0x18] sm:$0xff] %vm273, 0.0
      $region36: #{multi_header_self_attention.4} parent=31 // pred_fallthru
        _
      %v278 = vld [vmem:[%s238] sm:$0xff]
      %v279 = vmul.f32 %v278, 0.35355338
      %v280 = vld [vmem:[%s245] sm:$0xff]
      %v281 = vld [vmem:[%s252] sm:$0xff]
      %vm282 = vcmask 64512
      %v284 = vsel %vm282, %v279, 0
      %v287 = vsel %vm282, %v280, 0
      %289 = vmatprep.subr.mxu0 0.0
      %290 = vmatpush1.xpose.msra.mxu0 %v287
      %291 = vmatprep.subr.mxu0 0.0
      %292 = vmatpush1.xpose.msra.mxu0 0.0
      %293 = vmatprep.subr.mxu0 0.0
      %294 = vmatpush1.xpose.msra.mxu0 0.0
      %295 = vmatprep.subr.mxu0 0.0
      %296 = vmatpush1.xpose.msra.mxu0 0.0
      %297 = vmatprep.subr.mxu0 0.0
      %298 = vmatpush1.xpose.msra.mxu0 0.0
      %299 = vmatprep.subr.mxu0 0.0
      %300 = vmatpush1.xpose.msra.mxu0 0.0
      %301 = vmatprep.subr.mxu0 0.0
      %302 = vmatpush1.xpose.msra.mxu0 0.0
      %303 = vmatprep.subr.mxu0 0.0
      %304 = vmatpush1.xpose.msra.mxu0 0.0
      %305 = vmatprep.subr.mxu0 0.0
      %306 = vmatpush1.xpose.msra.mxu0 0.0
      %307 = vmatprep.subr.mxu0 0.0
      %308 = vmatpush1.xpose.msra.mxu0 0.0
      %309 = vmatprep.subr.mxu0 0.0
      %310 = vmatpush1.xpose.msra.mxu0 0.0
      %311 = vmatprep.subr.mxu0 0.0
      %312 = vmatpush1.xpose.msra.mxu0 0.0
      %313 = vmatprep.subr.mxu0 0.0
      %314 = vmatpush1.xpose.msra.mxu0 0.0
      %315 = vmatprep.subr.mxu0 0.0
      %316 = vmatpush1.xpose.msra.mxu0 0.0
      %317 = vmatprep.subr.mxu0 0.0
      %318 = vmatpush1.xpose.msra.mxu0 0.0
      %319 = vmatprep.subr.mxu0 0.0
      %320 = vmatpush1.xpose.msra.mxu0 0.0
      %321 = vmatprep.subr.mxu0 0.0
      %322 = vmatpush1.xpose.msra.mxu0 0.0
      %323 = vmatprep.subr.mxu0 0.0
      %324 = vmatpush1.xpose.msra.mxu0 0.0
      %325 = vmatprep.subr.mxu0 0.0
      %326 = vmatpush1.xpose.msra.mxu0 0.0
      %327 = vmatprep.subr.mxu0 0.0
      %328 = vmatpush1.xpose.msra.mxu0 0.0
      %329 = vmatprep.subr.mxu0 0.0
      %330 = vmatpush1.xpose.msra.mxu0 0.0
      %331 = vmatprep.subr.mxu0 0.0
      %332 = vmatpush1.xpose.msra.mxu0 0.0
      %333 = vmatprep.subr.mxu0 0.0
      %334 = vmatpush1.xpose.msra.mxu0 0.0
      %335 = vmatprep.subr.mxu0 0.0
      %336 = vmatpush1.xpose.msra.mxu0 0.0
      %337 = vmatprep.subr.mxu0 0.0
      %338 = vmatpush1.xpose.msra.mxu0 0.0
      %339 = vmatprep.subr.mxu0 0.0
      %340 = vmatpush1.xpose.msra.mxu0 0.0
      %341 = vmatprep.subr.mxu0 0.0
      %342 = vmatpush1.xpose.msra.mxu0 0.0
      %343 = vmatprep.subr.mxu0 0.0
      %344 = vmatpush1.xpose.msra.mxu0 0.0
      %345 = vmatprep.subr.mxu0 0.0
      %346 = vmatpush1.xpose.msra.mxu0 0.0
      %347 = vmatprep.subr.mxu0 0.0
      %348 = vmatpush1.xpose.msra.mxu0 0.0
      %349 = vmatprep.subr.mxu0 0.0
      %350 = vmatpush1.xpose.msra.mxu0 0.0
      %351 = vmatprep.subr.mxu0 0.0
      %352 = vmatpush1.xpose.msra.mxu0 0.0
      %353 = vmatprep.mubr.f32.mxu0 0.0
      %354 = vmatmul.mubr.f32.gmra.mrb[0].mxu0 %v284
      %v355 = vpop.f32.mrb[0].mxu0
      %v356 = vadd.f32 0.0, %v355
      %v357 = vpop.f32.mrb[0].mxu0
      %358 = vdwg.mxu0
      %v359 = vld [vmem:[#allocation2] sm:$0xff]
      %v360 = vld [vmem:[#allocation3] sm:$0xff]
      %v361 = vsel %vm282, %v356, -inf
      %362 = vmax.xlane.f32.xlu0 %v361
      %v363 = vpop.xlane.xlu0 %362
      %v364 = vmax.f32 %v359, %v363
      %v365 = vsub.f32 %v359, %v364
      %v366 = vmul.f32 %v365, 1.442695
      %v367 = vpow.pop %v366
      %369 = vset.pattern.permute.xlu0 0
      %370 = vperm.xlu0 %369, %v364
      %v371 = vpop.permute.xlu0 %370
      %v373 = vsub.f32 %v356, %v371
      %v374 = vmul.f32 %v373, 1.442695
      %v375 = vpow.pop %v374
      %v377 = vsel %vm282, %v375, 0
      %379 = vmatprep.subr.mxu0 0.0
      %380 = vmatpush1.msra.mxu0 %v281
      %381 = vmatprep.subr.mxu0 0.0
      %382 = vmatpush1.msra.mxu0 0.0
      %383 = vmatprep.subr.mxu0 0.0
      %384 = vmatpush1.msra.mxu0 0.0
      %385 = vmatprep.subr.mxu0 0.0
      %386 = vmatpush1.msra.mxu0 0.0
      %387 = vmatprep.subr.mxu0 0.0
      %388 = vmatpush1.msra.mxu0 0.0
      %389 = vmatprep.subr.mxu0 0.0
      %390 = vmatpush1.msra.mxu0 0.0
      %391 = vmatprep.subr.mxu0 0.0
      %392 = vmatpush1.msra.mxu0 0.0
      %393 = vmatprep.subr.mxu0 0.0
      %394 = vmatpush1.msra.mxu0 0.0
      %395 = vmatprep.subr.mxu0 0.0
      %396 = vmatpush1.msra.mxu0 0.0
      %397 = vmatprep.subr.mxu0 0.0
      %398 = vmatpush1.msra.mxu0 0.0
      %399 = vmatprep.subr.mxu0 0.0
      %400 = vmatpush1.msra.mxu0 0.0
      %401 = vmatprep.subr.mxu0 0.0
      %402 = vmatpush1.msra.mxu0 0.0
      %403 = vmatprep.subr.mxu0 0.0
      %404 = vmatpush1.msra.mxu0 0.0
      %405 = vmatprep.subr.mxu0 0.0
      %406 = vmatpush1.msra.mxu0 0.0
      %407 = vmatprep.subr.mxu0 0.0
      %408 = vmatpush1.msra.mxu0 0.0
      %409 = vmatprep.subr.mxu0 0.0
      %410 = vmatpush1.msra.mxu0 0.0
      %411 = vmatprep.subr.mxu0 0.0
      %412 = vmatpush1.msra.mxu0 0.0
      %413 = vmatprep.subr.mxu0 0.0
      %414 = vmatpush1.msra.mxu0 0.0
      %415 = vmatprep.subr.mxu0 0.0
      %416 = vmatpush1.msra.mxu0 0.0
      %417 = vmatprep.subr.mxu0 0.0
      %418 = vmatpush1.msra.mxu0 0.0
      %419 = vmatprep.subr.mxu0 0.0
      %420 = vmatpush1.msra.mxu0 0.0
      %421 = vmatprep.subr.mxu0 0.0
      %422 = vmatpush1.msra.mxu0 0.0
      %423 = vmatprep.subr.mxu0 0.0
      %424 = vmatpush1.msra.mxu0 0.0
      %425 = vmatprep.subr.mxu0 0.0
      %426 = vmatpush1.msra.mxu0 0.0
      %427 = vmatprep.subr.mxu0 0.0
      %428 = vmatpush1.msra.mxu0 0.0
      %429 = vmatprep.subr.mxu0 0.0
      %430 = vmatpush1.msra.mxu0 0.0
      %431 = vmatprep.subr.mxu0 0.0
      %432 = vmatpush1.msra.mxu0 0.0
      %433 = vmatprep.subr.mxu0 0.0
      %434 = vmatpush1.msra.mxu0 0.0
      %435 = vmatprep.subr.mxu0 0.0
      %436 = vmatpush1.msra.mxu0 0.0
      %437 = vmatprep.subr.mxu0 0.0
      %438 = vmatpush1.msra.mxu0 0.0
      %439 = vmatprep.subr.mxu0 0.0
      %440 = vmatpush1.msra.mxu0 0.0
      %441 = vmatprep.subr.mxu0 0.0
      %442 = vmatpush1.msra.mxu0 0.0
      %443 = vmatprep.mubr.f32.mxu0 0.0
      %444 = vmatmul.mubr.f32.gmra.mrb[0].mxu0 %v377
      %v445 = vpop.f32.mrb[0].mxu0
      %v446 = vadd.f32 0.0, %v445
      %v447 = vpop.f32.mrb[0].mxu0
      %448 = vdwg.mxu0
      %v449 = vmul.f32 %v367, %v360
      %v450 = vsel %vm282, %v375, 0.0
      %451 = vadd.xlane.f32.xlu0 %v450
      %v452 = vpop.xlane.xlu0 %451
      %v453 = vadd.f32 %v449, %v452
      %vm454 = vcmask 7168
      %455 = vst.msk [vmem:[#allocation3] sm:$0xff] %vm454, %v453
      %v456 = vld [vmem:[#allocation4] sm:$0xff]
      %458 = vset.pattern.permute.xlu0 0
      %459 = vperm.xlu0 %458, %v367
      %v460 = vpop.permute.xlu0 %459
      %v462 = vmul.f32 %v460, %v456
      %v463 = vadd.f32 %v462, %v446
      %464 = vst.msk [vmem:[#allocation4] sm:$0xff] %vm282, %v463
      %465 = vst.msk [vmem:[#allocation2] sm:$0xff] %vm454, %v364
      %v466 = vld [vmem:[%s238] sm:$0xff]
      %v467 = vmul.f32 %v466, 0.35355338
      %v468 = vld [vmem:[%s245] sm:$0xff]
      %v469 = vld [vmem:[%s252] sm:$0xff]
      %471 = vrot.lane.b32.xlu0 %v467, 120
      %v472 = vpop.permute.xlu0 %471
      %474 = vrot.lane.b32.xlu0 %v468, 120
      %v475 = vpop.permute.xlu0 %474
      %v476 = vsel %vm282, %v472, 0
      %v478 = vsel %vm282, %v475, 0
      %480 = vmatprep.subr.mxu0 0.0
      %481 = vmatpush1.xpose.msra.mxu0 %v478
      %482 = vmatprep.subr.mxu0 0.0
      %483 = vmatpush1.xpose.msra.mxu0 0.0
      %484 = vmatprep.subr.mxu0 0.0
      %485 = vmatpush1.xpose.msra.mxu0 0.0
      %486 = vmatprep.subr.mxu0 0.0
      %487 = vmatpush1.xpose.msra.mxu0 0.0
      %488 = vmatprep.subr.mxu0 0.0
      %489 = vmatpush1.xpose.msra.mxu0 0.0
      %490 = vmatprep.subr.mxu0 0.0
      %491 = vmatpush1.xpose.msra.mxu0 0.0
      %492 = vmatprep.subr.mxu0 0.0
      %493 = vmatpush1.xpose.msra.mxu0 0.0
      %494 = vmatprep.subr.mxu0 0.0
      %495 = vmatpush1.xpose.msra.mxu0 0.0
      %496 = vmatprep.subr.mxu0 0.0
      %497 = vmatpush1.xpose.msra.mxu0 0.0
      %498 = vmatprep.subr.mxu0 0.0
      %499 = vmatpush1.xpose.msra.mxu0 0.0
      %500 = vmatprep.subr.mxu0 0.0
      %501 = vmatpush1.xpose.msra.mxu0 0.0
      %502 = vmatprep.subr.mxu0 0.0
      %503 = vmatpush1.xpose.msra.mxu0 0.0
      %504 = vmatprep.subr.mxu0 0.0
      %505 = vmatpush1.xpose.msra.mxu0 0.0
      %506 = vmatprep.subr.mxu0 0.0
      %507 = vmatpush1.xpose.msra.mxu0 0.0
      %508 = vmatprep.subr.mxu0 0.0
      %509 = vmatpush1.xpose.msra.mxu0 0.0
      %510 = vmatprep.subr.mxu0 0.0
      %511 = vmatpush1.xpose.msra.mxu0 0.0
      %512 = vmatprep.subr.mxu0 0.0
      %513 = vmatpush1.xpose.msra.mxu0 0.0
      %514 = vmatprep.subr.mxu0 0.0
      %515 = vmatpush1.xpose.msra.mxu0 0.0
      %516 = vmatprep.subr.mxu0 0.0
      %517 = vmatpush1.xpose.msra.mxu0 0.0
      %518 = vmatprep.subr.mxu0 0.0
      %519 = vmatpush1.xpose.msra.mxu0 0.0
      %520 = vmatprep.subr.mxu0 0.0
      %521 = vmatpush1.xpose.msra.mxu0 0.0
      %522 = vmatprep.subr.mxu0 0.0
      %523 = vmatpush1.xpose.msra.mxu0 0.0
      %524 = vmatprep.subr.mxu0 0.0
      %525 = vmatpush1.xpose.msra.mxu0 0.0
      %526 = vmatprep.subr.mxu0 0.0
      %527 = vmatpush1.xpose.msra.mxu0 0.0
      %528 = vmatprep.subr.mxu0 0.0
      %529 = vmatpush1.xpose.msra.mxu0 0.0
      %530 = vmatprep.subr.mxu0 0.0
      %531 = vmatpush1.xpose.msra.mxu0 0.0
      %532 = vmatprep.subr.mxu0 0.0
      %533 = vmatpush1.xpose.msra.mxu0 0.0
      %534 = vmatprep.subr.mxu0 0.0
      %535 = vmatpush1.xpose.msra.mxu0 0.0
      %536 = vmatprep.subr.mxu0 0.0
      %537 = vmatpush1.xpose.msra.mxu0 0.0
      %538 = vmatprep.subr.mxu0 0.0
      %539 = vmatpush1.xpose.msra.mxu0 0.0
      %540 = vmatprep.subr.mxu0 0.0
      %541 = vmatpush1.xpose.msra.mxu0 0.0
      %542 = vmatprep.subr.mxu0 0.0
      %543 = vmatpush1.xpose.msra.mxu0 0.0
      %544 = vmatprep.mubr.f32.mxu0 0.0
      %545 = vmatmul.mubr.f32.gmra.mrb[0].mxu0 %v476
      %v546 = vpop.f32.mrb[0].mxu0
      %v547 = vadd.f32 0.0, %v546
      %v548 = vpop.f32.mrb[0].mxu0
      %549 = vdwg.mxu0
      %s550 = scalar_lea.vmem [#allocation2], 8
      %v551 = vld [vmem:[%s550] sm:$0xff]
      %s552 = scalar_lea.vmem [#allocation3], 8
      %v553 = vld [vmem:[%s552] sm:$0xff]
      %v554 = vsel %vm282, %v547, -inf
      %555 = vmax.xlane.f32.xlu0 %v554
      %v556 = vpop.xlane.xlu0 %555
      %v557 = vmax.f32 %v551, %v556
      %v558 = vsub.f32 %v551, %v557
      %v559 = vmul.f32 %v558, 1.442695
      %v560 = vpow.pop %v559
      %562 = vset.pattern.permute.xlu0 0
      %563 = vperm.xlu0 %562, %v557
      %v564 = vpop.permute.xlu0 %563
      %v566 = vsub.f32 %v547, %v564
      %v567 = vmul.f32 %v566, 1.442695
      %v568 = vpow.pop %v567
      %570 = vrot.lane.b32.xlu0 %v469, 120
      %v571 = vpop.permute.xlu0 %570
      %v574 = vsel %vm282, %v568, 0
      %576 = vmatprep.subr.mxu0 0.0
      %577 = vmatpush1.msra.mxu0 %v571
      %578 = vmatprep.subr.mxu0 0.0
      %579 = vmatpush1.msra.mxu0 0.0
      %580 = vmatprep.subr.mxu0 0.0
      %581 = vmatpush1.msra.mxu0 0.0
      %582 = vmatprep.subr.mxu0 0.0
      %583 = vmatpush1.msra.mxu0 0.0
      %584 = vmatprep.subr.mxu0 0.0
      %585 = vmatpush1.msra.mxu0 0.0
      %586 = vmatprep.subr.mxu0 0.0
      %587 = vmatpush1.msra.mxu0 0.0
      %588 = vmatprep.subr.mxu0 0.0
      %589 = vmatpush1.msra.mxu0 0.0
      %590 = vmatprep.subr.mxu0 0.0
      %591 = vmatpush1.msra.mxu0 0.0
      %592 = vmatprep.subr.mxu0 0.0
      %593 = vmatpush1.msra.mxu0 0.0
      %594 = vmatprep.subr.mxu0 0.0
      %595 = vmatpush1.msra.mxu0 0.0
      %596 = vmatprep.subr.mxu0 0.0
      %597 = vmatpush1.msra.mxu0 0.0
      %598 = vmatprep.subr.mxu0 0.0
      %599 = vmatpush1.msra.mxu0 0.0
      %600 = vmatprep.subr.mxu0 0.0
      %601 = vmatpush1.msra.mxu0 0.0
      %602 = vmatprep.subr.mxu0 0.0
      %603 = vmatpush1.msra.mxu0 0.0
      %604 = vmatprep.subr.mxu0 0.0
      %605 = vmatpush1.msra.mxu0 0.0
      %606 = vmatprep.subr.mxu0 0.0
      %607 = vmatpush1.msra.mxu0 0.0
      %608 = vmatprep.subr.mxu0 0.0
      %609 = vmatpush1.msra.mxu0 0.0
      %610 = vmatprep.subr.mxu0 0.0
      %611 = vmatpush1.msra.mxu0 0.0
      %612 = vmatprep.subr.mxu0 0.0
      %613 = vmatpush1.msra.mxu0 0.0
      %614 = vmatprep.subr.mxu0 0.0
      %615 = vmatpush1.msra.mxu0 0.0
      %616 = vmatprep.subr.mxu0 0.0
      %617 = vmatpush1.msra.mxu0 0.0
      %618 = vmatprep.subr.mxu0 0.0
      %619 = vmatpush1.msra.mxu0 0.0
      %620 = vmatprep.subr.mxu0 0.0
      %621 = vmatpush1.msra.mxu0 0.0
      %622 = vmatprep.subr.mxu0 0.0
      %623 = vmatpush1.msra.mxu0 0.0
      %624 = vmatprep.subr.mxu0 0.0
      %625 = vmatpush1.msra.mxu0 0.0
      %626 = vmatprep.subr.mxu0 0.0
      %627 = vmatpush1.msra.mxu0 0.0
      %628 = vmatprep.subr.mxu0 0.0
      %629 = vmatpush1.msra.mxu0 0.0
      %630 = vmatprep.subr.mxu0 0.0
      %631 = vmatpush1.msra.mxu0 0.0
      %632 = vmatprep.subr.mxu0 0.0
      %633 = vmatpush1.msra.mxu0 0.0
      %634 = vmatprep.subr.mxu0 0.0
      %635 = vmatpush1.msra.mxu0 0.0
      %636 = vmatprep.subr.mxu0 0.0
      %637 = vmatpush1.msra.mxu0 0.0
      %638 = vmatprep.subr.mxu0 0.0
      %639 = vmatpush1.msra.mxu0 0.0
      %640 = vmatprep.mubr.f32.mxu0 0.0
      %641 = vmatmul.mubr.f32.gmra.mrb[0].mxu0 %v574
      %v642 = vpop.f32.mrb[0].mxu0
      %v643 = vadd.f32 0.0, %v642
      %v644 = vpop.f32.mrb[0].mxu0
      %645 = vdwg.mxu0
      %v646 = vmul.f32 %v560, %v553
      %v647 = vsel %vm282, %v568, 0.0
      %648 = vadd.xlane.f32.xlu0 %v647
      %v649 = vpop.xlane.xlu0 %648
      %v650 = vadd.f32 %v646, %v649
      %651 = vst.msk [vmem:[%s552] sm:$0xff] %vm454, %v650
      %s652 = scalar_lea.vmem [#allocation4], 8
      %v653 = vld [vmem:[%s652] sm:$0xff]
      %655 = vset.pattern.permute.xlu0 0
      %656 = vperm.xlu0 %655, %v560
      %v657 = vpop.permute.xlu0 %656
      %v659 = vmul.f32 %v657, %v653
      %v660 = vadd.f32 %v659, %v643
      %661 = vst.msk [vmem:[%s652] sm:$0xff] %vm282, %v660
      %662 = vst.msk [vmem:[%s550] sm:$0xff] %vm454, %v557
      %v663 = vld [vmem:[%s238] sm:$0xff]
      %v664 = vmul.f32 %v663, 0.35355338
      %v665 = vld [vmem:[%s245] sm:$0xff]
      %v666 = vld [vmem:[%s252] sm:$0xff]
      %668 = vrot.lane.b32.xlu0 %v664, 112
      %v669 = vpop.permute.xlu0 %668
      %671 = vrot.lane.b32.xlu0 %v665, 112
      %v672 = vpop.permute.xlu0 %671
      %v673 = vsel %vm282, %v669, 0
      %v675 = vsel %vm282, %v672, 0
      %677 = vmatprep.subr.mxu0 0.0
      %678 = vmatpush1.xpose.msra.mxu0 %v675
      %679 = vmatprep.subr.mxu0 0.0
      %680 = vmatpush1.xpose.msra.mxu0 0.0
      %681 = vmatprep.subr.mxu0 0.0
      %682 = vmatpush1.xpose.msra.mxu0 0.0
      %683 = vmatprep.subr.mxu0 0.0
      %684 = vmatpush1.xpose.msra.mxu0 0.0
      %685 = vmatprep.subr.mxu0 0.0
      %686 = vmatpush1.xpose.msra.mxu0 0.0
      %687 = vmatprep.subr.mxu0 0.0
      %688 = vmatpush1.xpose.msra.mxu0 0.0
      %689 = vmatprep.subr.mxu0 0.0
      %690 = vmatpush1.xpose.msra.mxu0 0.0
      %691 = vmatprep.subr.mxu0 0.0
      %692 = vmatpush1.xpose.msra.mxu0 0.0
      %693 = vmatprep.subr.mxu0 0.0
      %694 = vmatpush1.xpose.msra.mxu0 0.0
      %695 = vmatprep.subr.mxu0 0.0
      %696 = vmatpush1.xpose.msra.mxu0 0.0
      %697 = vmatprep.subr.mxu0 0.0
      %698 = vmatpush1.xpose.msra.mxu0 0.0
      %699 = vmatprep.subr.mxu0 0.0
      %700 = vmatpush1.xpose.msra.mxu0 0.0
      %701 = vmatprep.subr.mxu0 0.0
      %702 = vmatpush1.xpose.msra.mxu0 0.0
      %703 = vmatprep.subr.mxu0 0.0
      %704 = vmatpush1.xpose.msra.mxu0 0.0
      %705 = vmatprep.subr.mxu0 0.0
      %706 = vmatpush1.xpose.msra.mxu0 0.0
      %707 = vmatprep.subr.mxu0 0.0
      %708 = vmatpush1.xpose.msra.mxu0 0.0
      %709 = vmatprep.subr.mxu0 0.0
      %710 = vmatpush1.xpose.msra.mxu0 0.0
      %711 = vmatprep.subr.mxu0 0.0
      %712 = vmatpush1.xpose.msra.mxu0 0.0
      %713 = vmatprep.subr.mxu0 0.0
      %714 = vmatpush1.xpose.msra.mxu0 0.0
      %715 = vmatprep.subr.mxu0 0.0
      %716 = vmatpush1.xpose.msra.mxu0 0.0
      %717 = vmatprep.subr.mxu0 0.0
      %718 = vmatpush1.xpose.msra.mxu0 0.0
      %719 = vmatprep.subr.mxu0 0.0
      %720 = vmatpush1.xpose.msra.mxu0 0.0
      %721 = vmatprep.subr.mxu0 0.0
      %722 = vmatpush1.xpose.msra.mxu0 0.0
      %723 = vmatprep.subr.mxu0 0.0
      %724 = vmatpush1.xpose.msra.mxu0 0.0
      %725 = vmatprep.subr.mxu0 0.0
      %726 = vmatpush1.xpose.msra.mxu0 0.0
      %727 = vmatprep.subr.mxu0 0.0
      %728 = vmatpush1.xpose.msra.mxu0 0.0
      %729 = vmatprep.subr.mxu0 0.0
      %730 = vmatpush1.xpose.msra.mxu0 0.0
      %731 = vmatprep.subr.mxu0 0.0
      %732 = vmatpush1.xpose.msra.mxu0 0.0
      %733 = vmatprep.subr.mxu0 0.0
      %734 = vmatpush1.xpose.msra.mxu0 0.0
      %735 = vmatprep.subr.mxu0 0.0
      %736 = vmatpush1.xpose.msra.mxu0 0.0
      %737 = vmatprep.subr.mxu0 0.0
      %738 = vmatpush1.xpose.msra.mxu0 0.0
      %739 = vmatprep.subr.mxu0 0.0
      %740 = vmatpush1.xpose.msra.mxu0 0.0
      %741 = vmatprep.mubr.f32.mxu0 0.0
      %742 = vmatmul.mubr.f32.gmra.mrb[0].mxu0 %v673
      %v743 = vpop.f32.mrb[0].mxu0
      %v744 = vadd.f32 0.0, %v743
      %v745 = vpop.f32.mrb[0].mxu0
      %746 = vdwg.mxu0
      %s747 = scalar_lea.vmem [#allocation2], 16
      %v748 = vld [vmem:[%s747] sm:$0xff]
      %s749 = scalar_lea.vmem [#allocation3], 16
      %v750 = vld [vmem:[%s749] sm:$0xff]
      %v751 = vsel %vm282, %v744, -inf
      %752 = vmax.xlane.f32.xlu0 %v751
      %v753 = vpop.xlane.xlu0 %752
      %v754 = vmax.f32 %v748, %v753
      %v755 = vsub.f32 %v748, %v754
      %v756 = vmul.f32 %v755, 1.442695
      %v757 = vpow.pop %v756
      %759 = vset.pattern.permute.xlu0 0
      %760 = vperm.xlu0 %759, %v754
      %v761 = vpop.permute.xlu0 %760
      %v763 = vsub.f32 %v744, %v761
      %v764 = vmul.f32 %v763, 1.442695
      %v765 = vpow.pop %v764
      %767 = vrot.lane.b32.xlu0 %v666, 112
      %v768 = vpop.permute.xlu0 %767
      %v771 = vsel %vm282, %v765, 0
      %773 = vmatprep.subr.mxu0 0.0
      %774 = vmatpush1.msra.mxu0 %v768
      %775 = vmatprep.subr.mxu0 0.0
      %776 = vmatpush1.msra.mxu0 0.0
      %777 = vmatprep.subr.mxu0 0.0
      %778 = vmatpush1.msra.mxu0 0.0
      %779 = vmatprep.subr.mxu0 0.0
      %780 = vmatpush1.msra.mxu0 0.0
      %781 = vmatprep.subr.mxu0 0.0
      %782 = vmatpush1.msra.mxu0 0.0
      %783 = vmatprep.subr.mxu0 0.0
      %784 = vmatpush1.msra.mxu0 0.0
      %785 = vmatprep.subr.mxu0 0.0
      %786 = vmatpush1.msra.mxu0 0.0
      %787 = vmatprep.subr.mxu0 0.0
      %788 = vmatpush1.msra.mxu0 0.0
      %789 = vmatprep.subr.mxu0 0.0
      %790 = vmatpush1.msra.mxu0 0.0
      %791 = vmatprep.subr.mxu0 0.0
      %792 = vmatpush1.msra.mxu0 0.0
      %793 = vmatprep.subr.mxu0 0.0
      %794 = vmatpush1.msra.mxu0 0.0
      %795 = vmatprep.subr.mxu0 0.0
      %796 = vmatpush1.msra.mxu0 0.0
      %797 = vmatprep.subr.mxu0 0.0
      %798 = vmatpush1.msra.mxu0 0.0
      %799 = vmatprep.subr.mxu0 0.0
      %800 = vmatpush1.msra.mxu0 0.0
      %801 = vmatprep.subr.mxu0 0.0
      %802 = vmatpush1.msra.mxu0 0.0
      %803 = vmatprep.subr.mxu0 0.0
      %804 = vmatpush1.msra.mxu0 0.0
      %805 = vmatprep.subr.mxu0 0.0
      %806 = vmatpush1.msra.mxu0 0.0
      %807 = vmatprep.subr.mxu0 0.0
      %808 = vmatpush1.msra.mxu0 0.0
      %809 = vmatprep.subr.mxu0 0.0
      %810 = vmatpush1.msra.mxu0 0.0
      %811 = vmatprep.subr.mxu0 0.0
      %812 = vmatpush1.msra.mxu0 0.0
      %813 = vmatprep.subr.mxu0 0.0
      %814 = vmatpush1.msra.mxu0 0.0
      %815 = vmatprep.subr.mxu0 0.0
      %816 = vmatpush1.msra.mxu0 0.0
      %817 = vmatprep.subr.mxu0 0.0
      %818 = vmatpush1.msra.mxu0 0.0
      %819 = vmatprep.subr.mxu0 0.0
      %820 = vmatpush1.msra.mxu0 0.0
      %821 = vmatprep.subr.mxu0 0.0
      %822 = vmatpush1.msra.mxu0 0.0
      %823 = vmatprep.subr.mxu0 0.0
      %824 = vmatpush1.msra.mxu0 0.0
      %825 = vmatprep.subr.mxu0 0.0
      %826 = vmatpush1.msra.mxu0 0.0
      %827 = vmatprep.subr.mxu0 0.0
      %828 = vmatpush1.msra.mxu0 0.0
      %829 = vmatprep.subr.mxu0 0.0
      %830 = vmatpush1.msra.mxu0 0.0
      %831 = vmatprep.subr.mxu0 0.0
      %832 = vmatpush1.msra.mxu0 0.0
      %833 = vmatprep.subr.mxu0 0.0
      %834 = vmatpush1.msra.mxu0 0.0
      %835 = vmatprep.subr.mxu0 0.0
      %836 = vmatpush1.msra.mxu0 0.0
      %837 = vmatprep.mubr.f32.mxu0 0.0
      %838 = vmatmul.mubr.f32.gmra.mrb[0].mxu0 %v771
      %v839 = vpop.f32.mrb[0].mxu0
      %v840 = vadd.f32 0.0, %v839
      %v841 = vpop.f32.mrb[0].mxu0
      %842 = vdwg.mxu0
      %v843 = vmul.f32 %v757, %v750
      %v844 = vsel %vm282, %v765, 0.0
      %845 = vadd.xlane.f32.xlu0 %v844
      %v846 = vpop.xlane.xlu0 %845
      %v847 = vadd.f32 %v843, %v846
      %848 = vst.msk [vmem:[%s749] sm:$0xff] %vm454, %v847
      %s849 = scalar_lea.vmem [#allocation4], 16
      %v850 = vld [vmem:[%s849] sm:$0xff]
      %852 = vset.pattern.permute.xlu0 0
      %853 = vperm.xlu0 %852, %v757
      %v854 = vpop.permute.xlu0 %853
      %v856 = vmul.f32 %v854, %v850
      %v857 = vadd.f32 %v856, %v840
      %858 = vst.msk [vmem:[%s849] sm:$0xff] %vm282, %v857
      %859 = vst.msk [vmem:[%s747] sm:$0xff] %vm454, %v754
      %v860 = vld [vmem:[%s238] sm:$0xff]
      %v861 = vmul.f32 %v860, 0.35355338
      %v862 = vld [vmem:[%s245] sm:$0xff]
      %v863 = vld [vmem:[%s252] sm:$0xff]
      %865 = vrot.lane.b32.xlu0 %v861, 104
      %v866 = vpop.permute.xlu0 %865
      %868 = vrot.lane.b32.xlu0 %v862, 104
      %v869 = vpop.permute.xlu0 %868
      %v870 = vsel %vm282, %v866, 0
      %v872 = vsel %vm282, %v869, 0
      %874 = vmatprep.subr.mxu0 0.0
      %875 = vmatpush1.xpose.msra.mxu0 %v872
      %876 = vmatprep.subr.mxu0 0.0
      %877 = vmatpush1.xpose.msra.mxu0 0.0
      %878 = vmatprep.subr.mxu0 0.0
      %879 = vmatpush1.xpose.msra.mxu0 0.0
      %880 = vmatprep.subr.mxu0 0.0
      %881 = vmatpush1.xpose.msra.mxu0 0.0
      %882 = vmatprep.subr.mxu0 0.0
      %883 = vmatpush1.xpose.msra.mxu0 0.0
      %884 = vmatprep.subr.mxu0 0.0
      %885 = vmatpush1.xpose.msra.mxu0 0.0
      %886 = vmatprep.subr.mxu0 0.0
      %887 = vmatpush1.xpose.msra.mxu0 0.0
      %888 = vmatprep.subr.mxu0 0.0
      %889 = vmatpush1.xpose.msra.mxu0 0.0
      %890 = vmatprep.subr.mxu0 0.0
      %891 = vmatpush1.xpose.msra.mxu0 0.0
      %892 = vmatprep.subr.mxu0 0.0
      %893 = vmatpush1.xpose.msra.mxu0 0.0
      %894 = vmatprep.subr.mxu0 0.0
      %895 = vmatpush1.xpose.msra.mxu0 0.0
      %896 = vmatprep.subr.mxu0 0.0
      %897 = vmatpush1.xpose.msra.mxu0 0.0
      %898 = vmatprep.subr.mxu0 0.0
      %899 = vmatpush1.xpose.msra.mxu0 0.0
      %900 = vmatprep.subr.mxu0 0.0
      %901 = vmatpush1.xpose.msra.mxu0 0.0
      %902 = vmatprep.subr.mxu0 0.0
      %903 = vmatpush1.xpose.msra.mxu0 0.0
      %904 = vmatprep.subr.mxu0 0.0
      %905 = vmatpush1.xpose.msra.mxu0 0.0
      %906 = vmatprep.subr.mxu0 0.0
      %907 = vmatpush1.xpose.msra.mxu0 0.0
      %908 = vmatprep.subr.mxu0 0.0
      %909 = vmatpush1.xpose.msra.mxu0 0.0
      %910 = vmatprep.subr.mxu0 0.0
      %911 = vmatpush1.xpose.msra.mxu0 0.0
      %912 = vmatprep.subr.mxu0 0.0
      %913 = vmatpush1.xpose.msra.mxu0 0.0
      %914 = vmatprep.subr.mxu0 0.0
      %915 = vmatpush1.xpose.msra.mxu0 0.0
      %916 = vmatprep.subr.mxu0 0.0
      %917 = vmatpush1.xpose.msra.mxu0 0.0
      %918 = vmatprep.subr.mxu0 0.0
      %919 = vmatpush1.xpose.msra.mxu0 0.0
      %920 = vmatprep.subr.mxu0 0.0
      %921 = vmatpush1.xpose.msra.mxu0 0.0
      %922 = vmatprep.subr.mxu0 0.0
      %923 = vmatpush1.xpose.msra.mxu0 0.0
      %924 = vmatprep.subr.mxu0 0.0
      %925 = vmatpush1.xpose.msra.mxu0 0.0
      %926 = vmatprep.subr.mxu0 0.0
      %927 = vmatpush1.xpose.msra.mxu0 0.0
      %928 = vmatprep.subr.mxu0 0.0
      %929 = vmatpush1.xpose.msra.mxu0 0.0
      %930 = vmatprep.subr.mxu0 0.0
      %931 = vmatpush1.xpose.msra.mxu0 0.0
      %932 = vmatprep.subr.mxu0 0.0
      %933 = vmatpush1.xpose.msra.mxu0 0.0
      %934 = vmatprep.subr.mxu0 0.0
      %935 = vmatpush1.xpose.msra.mxu0 0.0
      %936 = vmatprep.subr.mxu0 0.0
      %937 = vmatpush1.xpose.msra.mxu0 0.0
      %938 = vmatprep.mubr.f32.mxu0 0.0
      %939 = vmatmul.mubr.f32.gmra.mrb[0].mxu0 %v870
      %v940 = vpop.f32.mrb[0].mxu0
      %v941 = vadd.f32 0.0, %v940
      %v942 = vpop.f32.mrb[0].mxu0
      %943 = vdwg.mxu0
      %s944 = scalar_lea.vmem [#allocation2], 24
      %v945 = vld [vmem:[%s944] sm:$0xff]
      %s946 = scalar_lea.vmem [#allocation3], 24
      %v947 = vld [vmem:[%s946] sm:$0xff]
      %v948 = vsel %vm282, %v941, -inf
      %949 = vmax.xlane.f32.xlu0 %v948
      %v950 = vpop.xlane.xlu0 %949
      %v951 = vmax.f32 %v945, %v950
      %v952 = vsub.f32 %v945, %v951
      %v953 = vmul.f32 %v952, 1.442695
      %v954 = vpow.pop %v953
      %956 = vset.pattern.permute.xlu0 0
      %957 = vperm.xlu0 %956, %v951
      %v958 = vpop.permute.xlu0 %957
      %v960 = vsub.f32 %v941, %v958
      %v961 = vmul.f32 %v960, 1.442695
      %v962 = vpow.pop %v961
      %964 = vrot.lane.b32.xlu0 %v863, 104
      %v965 = vpop.permute.xlu0 %964
      %v968 = vsel %vm282, %v962, 0
      %970 = vmatprep.subr.mxu0 0.0
      %971 = vmatpush1.msra.mxu0 %v965
      %972 = vmatprep.subr.mxu0 0.0
      %973 = vmatpush1.msra.mxu0 0.0
      %974 = vmatprep.subr.mxu0 0.0
      %975 = vmatpush1.msra.mxu0 0.0
      %976 = vmatprep.subr.mxu0 0.0
      %977 = vmatpush1.msra.mxu0 0.0
      %978 = vmatprep.subr.mxu0 0.0
      %979 = vmatpush1.msra.mxu0 0.0
      %980 = vmatprep.subr.mxu0 0.0
      %981 = vmatpush1.msra.mxu0 0.0
      %982 = vmatprep.subr.mxu0 0.0
      %983 = vmatpush1.msra.mxu0 0.0
      %984 = vmatprep.subr.mxu0 0.0
      %985 = vmatpush1.msra.mxu0 0.0
      %986 = vmatprep.subr.mxu0 0.0
      %987 = vmatpush1.msra.mxu0 0.0
      %988 = vmatprep.subr.mxu0 0.0
      %989 = vmatpush1.msra.mxu0 0.0
      %990 = vmatprep.subr.mxu0 0.0
      %991 = vmatpush1.msra.mxu0 0.0
      %992 = vmatprep.subr.mxu0 0.0
      %993 = vmatpush1.msra.mxu0 0.0
      %994 = vmatprep.subr.mxu0 0.0
      %995 = vmatpush1.msra.mxu0 0.0
      %996 = vmatprep.subr.mxu0 0.0
      %997 = vmatpush1.msra.mxu0 0.0
      %998 = vmatprep.subr.mxu0 0.0
      %999 = vmatpush1.msra.mxu0 0.0
      %1000 = vmatprep.subr.mxu0 0.0
      %1001 = vmatpush1.msra.mxu0 0.0
      %1002 = vmatprep.subr.mxu0 0.0
      %1003 = vmatpush1.msra.mxu0 0.0
      %1004 = vmatprep.subr.mxu0 0.0
      %1005 = vmatpush1.msra.mxu0 0.0
      %1006 = vmatprep.subr.mxu0 0.0
      %1007 = vmatpush1.msra.mxu0 0.0
      %1008 = vmatprep.subr.mxu0 0.0
      %1009 = vmatpush1.msra.mxu0 0.0
      %1010 = vmatprep.subr.mxu0 0.0
      %1011 = vmatpush1.msra.mxu0 0.0
      %1012 = vmatprep.subr.mxu0 0.0
      %1013 = vmatpush1.msra.mxu0 0.0
      %1014 = vmatprep.subr.mxu0 0.0
      %1015 = vmatpush1.msra.mxu0 0.0
      %1016 = vmatprep.subr.mxu0 0.0
      %1017 = vmatpush1.msra.mxu0 0.0
      %1018 = vmatprep.subr.mxu0 0.0
      %1019 = vmatpush1.msra.mxu0 0.0
      %1020 = vmatprep.subr.mxu0 0.0
      %1021 = vmatpush1.msra.mxu0 0.0
      %1022 = vmatprep.subr.mxu0 0.0
      %1023 = vmatpush1.msra.mxu0 0.0
      %1024 = vmatprep.subr.mxu0 0.0
      %1025 = vmatpush1.msra.mxu0 0.0
      %1026 = vmatprep.subr.mxu0 0.0
      %1027 = vmatpush1.msra.mxu0 0.0
      %1028 = vmatprep.subr.mxu0 0.0
      %1029 = vmatpush1.msra.mxu0 0.0
      %1030 = vmatprep.subr.mxu0 0.0
      %1031 = vmatpush1.msra.mxu0 0.0
      %1032 = vmatprep.subr.mxu0 0.0
      %1033 = vmatpush1.msra.mxu0 0.0
      %1034 = vmatprep.mubr.f32.mxu0 0.0
      %1035 = vmatmul.mubr.f32.gmra.mrb[0].mxu0 %v968
      %v1036 = vpop.f32.mrb[0].mxu0
      %v1037 = vadd.f32 0.0, %v1036
      %v1038 = vpop.f32.mrb[0].mxu0
      %1039 = vdwg.mxu0
      %v1040 = vmul.f32 %v954, %v947
      %v1041 = vsel %vm282, %v962, 0.0
      %1042 = vadd.xlane.f32.xlu0 %v1041
      %v1043 = vpop.xlane.xlu0 %1042
      %v1044 = vadd.f32 %v1040, %v1043
      %1045 = vst.msk [vmem:[%s946] sm:$0xff] %vm454, %v1044
      %s1046 = scalar_lea.vmem [#allocation4], 24
      %v1047 = vld [vmem:[%s1046] sm:$0xff]
      %1049 = vset.pattern.permute.xlu0 0
      %1050 = vperm.xlu0 %1049, %v954
      %v1051 = vpop.permute.xlu0 %1050
      %v1053 = vmul.f32 %v1051, %v1047
      %v1054 = vadd.f32 %v1053, %v1037
      %1055 = vst.msk [vmem:[%s1046] sm:$0xff] %vm282, %v1054
      %1056 = vst.msk [vmem:[%s944] sm:$0xff] %vm454, %v951
      // Predicated region
      $region37: #{multi_header_self_attention.4} parent=31 // pred_check
        %p1057 = pneg %p260
      $region38: #{multi_header_self_attention.4} parent=31 // pred_check_branch
        %1059 = sbr.rel (%p1057) target = $region40
      $region39: #{multi_header_self_attention.4} parent=31 // pred_region
        %v1060 = vld [vmem:[#allocation3] sm:$0xff]
        %v1061 = vrcp.pop %v1060
        %v1062 = vld [vmem:[#allocation4] sm:$0xff]
        %1064 = vset.pattern.permute.xlu0 0
        %1065 = vperm.xlu0 %1064, %v1061
        %v1066 = vpop.permute.xlu0 %1065
        %v1068 = vmul.f32 %v1062, %v1066
        %1069 = vst.msk [vmem:[%s259] sm:$0xff] %vm282, %v1068
        %v1070 = vld [vmem:[%s552] sm:$0xff]
        %v1071 = vrcp.pop %v1070
        %v1072 = vld [vmem:[%s652] sm:$0xff]
        %1074 = vset.pattern.permute.xlu0 0
        %1075 = vperm.xlu0 %1074, %v1071
        %v1076 = vpop.permute.xlu0 %1075
        %v1078 = vmul.f32 %v1072, %v1076
        %1080 = vrot.lane.b32.xlu0 %v1078, 8
        %v1081 = vpop.permute.xlu0 %1080
        %vm1083 = vcmask 130112
        %1084 = vst.msk [vmem:[%s259] sm:$0xff] %vm1083, %v1081
        %v1085 = vld [vmem:[%s749] sm:$0xff]
        %v1086 = vrcp.pop %v1085
        %v1087 = vld [vmem:[%s849] sm:$0xff]
        %1089 = vset.pattern.permute.xlu0 0
        %1090 = vperm.xlu0 %1089, %v1086
        %v1091 = vpop.permute.xlu0 %1090
        %v1093 = vmul.f32 %v1087, %v1091
        %1095 = vrot.lane.b32.xlu0 %v1093, 16
        %v1096 = vpop.permute.xlu0 %1095
        %vm1098 = vcmask 195712
        %1099 = vst.msk [vmem:[%s259] sm:$0xff] %vm1098, %v1096
        %v1100 = vld [vmem:[%s946] sm:$0xff]
        %v1101 = vrcp.pop %v1100
        %v1102 = vld [vmem:[%s1046] sm:$0xff]
        %1104 = vset.pattern.permute.xlu0 0
        %1105 = vperm.xlu0 %1104, %v1101
        %v1106 = vpop.permute.xlu0 %1105
        %v1108 = vmul.f32 %v1102, %v1106
        %1110 = vrot.lane.b32.xlu0 %v1108, 24
        %v1111 = vpop.permute.xlu0 %1110
        %vm1113 = vcmask 261312
        %1114 = vst.msk [vmem:[%s259] sm:$0xff] %vm1113, %v1111
      $region40: #{multi_header_self_attention.4} parent=31 // pred_fallthru
        _
      %p1115 = scmp.lt.s32.totalorder %s19, 1
      %s1116 = scalar_select %p1115, %s19, 1
      %p1117 = scmp.lt.s32.totalorder %s20, 0
      %s1118 = scalar_select %p1117, %s20, 0
      %s1119 = sadd.s32 %s1118, %s1116
      %s1120 = smul.addr %s1119, 8
      %s1121 = scalar_lea.vmem %s3, %s1120
      // Predicated region
      $region41: #{multi_header_self_attention.4} parent=31 // pred_check
        %p1122 = pneg %p137
      $region42: #{multi_header_self_attention.4} parent=31 // pred_check_branch
        %1124 = sbr.rel (%p1122) target = $region44
      $region43: #{multi_header_self_attention.4} parent=31 // pred_region
        _
      $region44: #{multi_header_self_attention.4} parent=31 // pred_fallthru
        _
    $region32: #{multi_header_self_attention.4} parent=5 // pred_fallthru
      _
    %p1125 = scmp.le.s32.totalorder 2, %s9
    // Predicated region
    $region45: #{multi_header_self_attention.4} parent=5 // pred_check
      %p1126 = pneg %p1125
    $region46: #{multi_header_self_attention.4} parent=5 // pred_check_branch
      %1128 = sbr.rel (%p1126) target = $region48
    $region47: #{multi_header_self_attention.4} parent=5 // pred_region
      %s1129 = ssub.s32 %s9, 2
      // Predicated region
      $region49: #{multi_header_self_attention.4} parent=47 // pred_check
        %p1130 = pneg %p143
      $region50: #{multi_header_self_attention.4} parent=47 // pred_check_branch
        %1132 = sbr.rel (%p1130) target = $region52
      $region51: #{multi_header_self_attention.4} parent=47 // pred_region
        %p1133 = scmp.lt.s32.totalorder %s22, 1
        %s1134 = scalar_select %p1133, %s22, 1
        %p1135 = scmp.lt.s32.totalorder %s23, 0
        %s1136 = scalar_select %p1135, %s23, 0
        %s1137 = sadd.s32 %s1136, %s1134
        %s1138 = smul.addr %s1137, 8
        %s1139 = scalar_lea.vmem %s3, %s1138
      $region52: #{multi_header_self_attention.4} parent=47 // pred_fallthru
        _
    $region48: #{multi_header_self_attention.4} parent=5 // pred_fallthru
      _
  $region6: #{multi_header_self_attention.4} parent=0 // loop_footer
    %s13 = sadd.s32 1, %s9
  $region7: #{multi_header_self_attention.4} parent=0 // loop_footer_branch
    %8 = sbr.rel target = $region3
  $region8: #{multi_header_self_attention.4} parent=0 // loop_exit
    _

</llo_original>
